<compile_context>
chip_gen: v5e
topology: v5e:2x2
jax: 0.10.0
libtpu: 0.0.40
codegen_flags: <defaults>
</compile_context>

<pallas_src>
import functools

import jax
import jax.numpy as jnp
from jax import lax
from jax.experimental import pallas as pl
from jax.experimental.pallas import tpu as pltpu


def _inverted_residual_kernel(
    x_ref,      # (1, H, W, Cin)    activation tile, NHWC, f32
    w1_ref,     # (Cin, hidden)     expand weights (BN1 scale folded), bf16
    wd_ref,     # (3, 3, hidden)    depthwise weights (BN2 scale folded), f32
    w2t_ref,    # (Cout, hidden)    project weights^T (BN3 scale folded), bf16
    b12_ref,    # (2, hidden)       [b1; b2] folded BN biases, f32
    b3_ref,     # (Cout, 1)         folded BN3 bias, f32
    out_ref,    # (1, Cout, Ho*Wo)  NCHW-flat output (lane dense)
    hpad_ref,   # VMEM scratch (Hp, Wp, hidden) f32: padded expanded activation
    *, stride, dilation, use_res_connect,
):
    _, H, W, Cin = x_ref.shape
    Hp, Wp, hidden = hpad_ref.shape
    Cout = out_ref.shape[1]
    pad = dilation

    b1 = b12_ref[0:1, :]                                   # (1, hidden)
    b2 = b12_ref[1:2, :]                                   # (1, hidden)

    # ---- 1x1 expand + BN1 bias + ReLU6 on the unpadded H*W interior only ----
    x3 = x_ref[0]                                          # (H, W, Cin) f32
    xf = x3.reshape(H * W, Cin)                            # no-op relayout
    h = jnp.dot(xf.astype(jnp.bfloat16), w1_ref[...],
                preferred_element_type=jnp.float32)        # (H*W, hidden)
    h = jnp.clip(h + b1, 0.0, 6.0)

    # ---- build the padded expanded map in VMEM scratch ----
    # zero padding -> 1x1 conv -> BN1 -> ReLU6 gives clip(b1, 0, 6) per channel on
    # the border, so the padded copy of x is never needed in HBM.
    border = jnp.clip(b1, 0.0, 6.0)                        # (1, hidden)
    hpad_ref[...] = jnp.broadcast_to(border, (Hp, Wp, hidden))
    hpad_ref[pad:pad + H, pad:pad + W, :] = h.reshape(H, W, hidden)

    # ---- 3x3 depthwise conv (BN2 scale folded into wd), stride-1 taps on VPU ----
    wd = wd_ref[...]                                       # (3, 3, hidden) f32
    acc = jnp.zeros((H, W, hidden), jnp.float32)
    for ky in range(3):
        for kx in range(3):
            y0 = ky * dilation
            x0 = kx * dilation
            patch = hpad_ref[y0:y0 + H, x0:x0 + W, :]      # static contiguous slice
            acc = acc + patch * wd[ky:ky + 1, kx:kx + 1, :]  # (1,1,hidden) lane bcast
    acc = jnp.clip(acc + b2, 0.0, 6.0)
    if stride > 1:
        # single strided subsample instead of 9 strided slices in the tap loop
        acc = acc[::stride, ::stride, :]
    Ho, Wo = acc.shape[0], acc.shape[1]
    acc2 = acc.reshape(Ho * Wo, hidden)                    # (Ho*Wo, hidden)

    # ---- 1x1 project + BN3 bias, emitted lane-dense as (Cout, Ho*Wo) ----
    # y[c, p] = sum_h w2t[c, h] * acc2[p, h]   (A @ B^T, standard MXU pattern)
    y = lax.dot_general(w2t_ref[...], acc2.astype(jnp.bfloat16),
                        dimension_numbers=(((1,), (1,)), ((), ())),
                        preferred_element_type=jnp.float32)
    y = y + b3_ref[...]                                    # (Cout, 1) lane-broadcast

    if use_res_connect:
        # Residual from the same x tile: (H*W, Cin) -> (Cin, H*W) transpose on the
        # MXU with an identity matrix (exact in f32; no second DMA of x).
        rows = lax.broadcasted_iota(jnp.int32, (Cin, Cin), 0)
        cols = lax.broadcasted_iota(jnp.int32, (Cin, Cin), 1)
        eye = (rows == cols).astype(jnp.float32)
        xr = lax.dot_general(eye, xf,
                             dimension_numbers=(((1,), (1,)), ((), ())),
                             preferred_element_type=jnp.float32)   # (Cin, H*W)
        y = y + xr

    out_ref[...] = y.reshape(1, Cout, Ho * Wo).astype(out_ref.dtype)


def _bn_fold(gamma, beta, mean, var, eps=1e-5):
    scale = gamma / jnp.sqrt(var + eps)
    bias = beta - mean * scale
    return scale.astype(jnp.float32), bias.astype(jnp.float32)


@functools.partial(jax.jit, static_argnames=("stride", "dilation"))
def inverted_residual_forward(x_nchw, params, *, stride, dilation):
    """x_nchw: (N, Cin, H, W) float32. Returns (N, Cout, Ho, Wo)."""
    w1, bn1, wd, bn2, w2, bn3 = params
    Cin, hidden = w1.shape
    Cout = w2.shape[1]
    N, C, H, W = x_nchw.shape
    assert C == Cin
    assert stride in (1, 2)

    use_res_connect = (stride == 1) and (Cin == Cout)
    pad = dilation                                # fixed_padding for k=3: pad=dilation/side
    Hp, Wp = H + 2 * pad, W + 2 * pad
    Ho = (H - 1) // stride + 1                    # = (Hp - (2*dilation+1)) // stride + 1
    Wo = (W - 1) // stride + 1

    s1, b1 = _bn_fold(*bn1)
    s2, b2 = _bn_fold(*bn2)
    s3, b3 = _bn_fold(*bn3)

    # Fold BN scales into the conv weights on the host; kernel only adds biases.
    w1f = (w1 * s1[None, :]).astype(jnp.bfloat16)            # (Cin, hidden)
    wdf = (wd * s2[None, None, :]).astype(jnp.float32)       # (3, 3, hidden)
    w2ft = (w2 * s3[None, :]).T.astype(jnp.bfloat16)         # (Cout, hidden)
    b12 = jnp.stack([b1, b2], axis=0)                        # (2, hidden)
    b3c = b3.reshape(Cout, 1)                                # (Cout, 1)

    # Single NHWC view of the activation (no padded copy materialized in HBM).
    x_nhwc = jnp.transpose(x_nchw, (0, 2, 3, 1))

    kernel = functools.partial(
        _inverted_residual_kernel,
        stride=stride, dilation=dilation, use_res_connect=use_res_connect,
    )

    out_flat = pl.pallas_call(
        kernel,
        out_shape=jax.ShapeDtypeStruct((N, Cout, Ho * Wo), x_nchw.dtype),
        grid_spec=pltpu.PrefetchScalarGridSpec(
            num_scalar_prefetch=0,
            grid=(N,),
            in_specs=[
                pl.BlockSpec((1, H, W, Cin), lambda n: (n, 0, 0, 0)),   # x (NHWC)
                pl.BlockSpec((Cin, hidden), lambda n: (0, 0)),          # w1 folded
                pl.BlockSpec((3, 3, hidden), lambda n: (0, 0, 0)),      # wd folded
                pl.BlockSpec((Cout, hidden), lambda n: (0, 0)),         # w2^T folded
                pl.BlockSpec((2, hidden), lambda n: (0, 0)),            # [b1; b2]
                pl.BlockSpec((Cout, 1), lambda n: (0, 0)),              # b3
            ],
            out_specs=pl.BlockSpec((1, Cout, Ho * Wo), lambda n: (n, 0, 0)),
            scratch_shapes=[pltpu.VMEM((Hp, Wp, hidden), jnp.float32)],
        ),
        compiler_params=pltpu.CompilerParams(
            dimension_semantics=("parallel",),
        ),
    )(x_nhwc, w1f, wdf, w2ft, b12, b3c)

    # (N, Cout, Ho*Wo) is already NCHW-flat -> free reshape, no transpose.
    return out_flat.reshape(N, Cout, Ho, Wo)


def _reference(x_nchw, params, *, stride, dilation):
    """Pure-JAX f32 reference matching the PyTorch module (eval-mode BN)."""
    w1, bn1, wd, bn2, w2, bn3 = params
    eps = 1e-5

    def bn_apply(z, bn):
        gamma, beta, mean, var = bn
        sh = (1, -1, 1, 1)
        return (z - mean.reshape(sh)) / jnp.sqrt(var.reshape(sh) + eps) \
            * gamma.reshape(sh) + beta.reshape(sh)

    pad = dilation
    xp = jnp.pad(x_nchw, ((0, 0), (0, 0), (pad, pad), (pad, pad)))
    h = jnp.einsum('nchw,ce->nehw', xp, w1)                  # 1x1 expand
    h = jnp.clip(bn_apply(h, bn1), 0.0, 6.0)
    hidden = w1.shape[1]
    dw = jnp.transpose(wd, (2, 0, 1))[:, None, :, :]         # (hidden, 1, 3, 3)
    d = lax.conv_general_dilated(
        h, dw, window_strides=(stride, stride), padding='VALID',
        rhs_dilation=(dilation, dilation),
        dimension_numbers=('NCHW', 'OIHW', 'NCHW'),
        feature_group_count=hidden)
    d = jnp.clip(bn_apply(d, bn2), 0.0, 6.0)
    y = jnp.einsum('nehw,eo->nohw', d, w2)                   # 1x1 project
    y = bn_apply(y, bn3)
    if stride == 1 and x_nchw.shape[1] == w2.shape[1]:
        y = y + x_nchw
    return y


def make_params(key, inp, oup, expand_ratio):
    """Deterministic synthetic parameters matching the PyTorch module shapes."""
    hidden = round(inp * expand_ratio)
    ks = jax.random.split(key, 6)

    w1 = 0.1 * jax.random.normal(ks[0], (inp, hidden), jnp.float32)   # 1x1 expand
    wd = 0.1 * jax.random.normal(ks[1], (3, 3, hidden), jnp.float32)  # 3x3 depthwise
    w2 = 0.1 * jax.random.normal(ks[2], (hidden, oup), jnp.float32)   # 1x1 project

    def bn(k, c):
        kg, kb, km, kv = jax.random.split(k, 4)
        gamma = 1.0 + 0.1 * jax.random.normal(kg, (c,), jnp.float32)
        beta = 0.1 * jax.random.normal(kb, (c,), jnp.float32)
        mean = 0.1 * jax.random.normal(km, (c,), jnp.float32)
        var = jax.random.uniform(kv, (c,), jnp.float32, 0.5, 1.5)
        return (gamma, beta, mean, var)

    bn1 = bn(ks[3], hidden)
    bn2 = bn(ks[4], hidden)
    bn3 = bn(ks[5], oup)
    return (w1, bn1, wd, bn2, w2, bn3)


if __name__ == "__main__":
    # Module config: inp=oup=4, stride=1, dilation=1, expand_ratio=6
    #  -> hidden_dim=24, residual connection active.
    inp, oup, stride, dilation, expand_ratio = 4, 4, 1, 1, 6

    key = jax.random.PRNGKey(0)
    kx, kp = jax.random.split(key)
    x = jax.random.normal(kx, (2, inp, 16, 16), jnp.float32)   # NCHW, like PyTorch
    params = make_params(kp, inp, oup, expand_ratio)

    out = inverted_residual_forward(x, params, stride=stride, dilation=dilation)
    out = jax.block_until_ready(out)
    assert out.shape == (2, oup, 16, 16), out.shape

    ref = _reference(x, params, stride=stride, dilation=dilation)
    err = float(jnp.max(jnp.abs(out - ref)))
    assert err < 5e-2, f"max abs error vs reference: {err}"

    print("KERNEL_OK")
</pallas_src>

<mosaic_0001>
module attributes {stable_mosaic.version = 11 : i64} {
  func.func @_inverted_residual_kernel(%arg0: i32, %arg1: memref<1x16x16x4xf32, #tpu.memory_space<vmem>>, %arg2: memref<4x24xbf16, #tpu.memory_space<vmem>>, %arg3: memref<3x3x24xf32, #tpu.memory_space<vmem>>, %arg4: memref<4x24xbf16, #tpu.memory_space<vmem>>, %arg5: memref<2x24xf32, #tpu.memory_space<vmem>>, %arg6: memref<4x1xf32, #tpu.memory_space<vmem>>, %arg7: memref<1x4x256xf32, #tpu.memory_space<vmem>>, %arg8: memref<18x18x24xf32, #tpu.memory_space<vmem>>) attributes {dimension_semantics = [#tpu.dimension_semantics<parallel>], iteration_bounds = array<i64: 2>, scalar_prefetch = 0 : i64, scratch_operands = 1 : i64, tpu.core_type = #tpu.core_type<tc>, window_params = [{transform_indices = @transform_0, window_bounds = array<i64: 1, 16, 16, 4>}, {pipeline_mode = #tpu.pipeline_mode<synchronous>, transform_indices = @transform_1, window_bounds = array<i64: 4, 24>}, {pipeline_mode = #tpu.pipeline_mode<synchronous>, transform_indices = @transform_2, window_bounds = array<i64: 3, 3, 24>}, {pipeline_mode = #tpu.pipeline_mode<synchronous>, transform_indices = @transform_3, window_bounds = array<i64: 4, 24>}, {pipeline_mode = #tpu.pipeline_mode<synchronous>, transform_indices = @transform_4, window_bounds = array<i64: 2, 24>}, {pipeline_mode = #tpu.pipeline_mode<synchronous>, transform_indices = @transform_5, window_bounds = array<i64: 4, 1>}, {transform_indices = @transform_6, window_bounds = array<i64: 1, 4, 256>}]} {
    %c0 = arith.constant 0 : index
    %c0_0 = arith.constant 0 : index
    %0 = vector.load %arg5[%c0, %c0_0] : memref<2x24xf32, #tpu.memory_space<vmem>>, vector<1x24xf32>
    %c1 = arith.constant 1 : index
    %c0_1 = arith.constant 0 : index
    %1 = vector.load %arg5[%c1, %c0_1] : memref<2x24xf32, #tpu.memory_space<vmem>>, vector<1x24xf32>
    %c0_2 = arith.constant 0 : index
    %c0_3 = arith.constant 0 : index
    %c0_4 = arith.constant 0 : index
    %c0_5 = arith.constant 0 : index
    %2 = vector.load %arg1[%c0_2, %c0_3, %c0_4, %c0_5] : memref<1x16x16x4xf32, #tpu.memory_space<vmem>>, vector<1x16x16x4xf32>
    %3 = vector.shape_cast %2 : vector<1x16x16x4xf32> to vector<16x16x4xf32>
    %4 = vector.shape_cast %3 : vector<16x16x4xf32> to vector<256x4xf32>
    %5 = arith.truncf %4 : vector<256x4xf32> to vector<256x4xbf16>
    %c0_6 = arith.constant 0 : index
    %c0_7 = arith.constant 0 : index
    %6 = vector.load %arg2[%c0_6, %c0_7] : memref<4x24xbf16, #tpu.memory_space<vmem>>, vector<4x24xbf16>
    %cst = arith.constant dense<0.000000e+00> : vector<256x24xf32>
    %7 = tpu.matmul %5, %6, %cst {dimension_numbers = #tpu.dot_dimension_numbers<[1], [0], [0], [1], [0, 0, 1, 1], [], []>} : vector<256x4xbf16>, vector<4x24xbf16>, vector<256x24xf32> -> vector<256x24xf32>
    %8 = vector.broadcast %0 : vector<1x24xf32> to vector<256x24xf32>
    %9 = arith.addf %7, %8 : vector<256x24xf32>
    %cst_8 = arith.constant 0.000000e+00 : f32
    %cst_9 = arith.constant 6.000000e+00 : f32
    %10 = vector.broadcast %cst_8 : f32 to vector<256x24xf32>
    %11 = arith.maximumf %10, %9 : vector<256x24xf32>
    %12 = vector.broadcast %cst_9 : f32 to vector<256x24xf32>
    %13 = arith.minimumf %12, %11 : vector<256x24xf32>
    %cst_10 = arith.constant 0.000000e+00 : f32
    %cst_11 = arith.constant 6.000000e+00 : f32
    %14 = vector.broadcast %cst_10 : f32 to vector<1x24xf32>
    %15 = arith.maximumf %14, %0 : vector<1x24xf32>
    %16 = vector.broadcast %cst_11 : f32 to vector<1x24xf32>
    %17 = arith.minimumf %16, %15 : vector<1x24xf32>
    %18 = vector.shape_cast %17 : vector<1x24xf32> to vector<1x1x24xf32>
    %19 = vector.broadcast %18 : vector<1x1x24xf32> to vector<18x18x24xf32>
    %c0_12 = arith.constant 0 : index
    %c0_13 = arith.constant 0 : index
    %c0_14 = arith.constant 0 : index
    %20 = vector.load %arg8[%c0_12, %c0_13, %c0_14] : memref<18x18x24xf32, #tpu.memory_space<vmem>>, vector<18x18x24xf32>
    tpu.vector_store %arg8[%c0_12, %c0_13, %c0_14], %19 {strides = array<i32>} : memref<18x18x24xf32, #tpu.memory_space<vmem>>, vector<18x18x24xf32>,
    %21 = vector.shape_cast %13 : vector<256x24xf32> to vector<16x16x24xf32>
    %c1_15 = arith.constant 1 : index
    %c1_16 = arith.constant 1 : index
    %c0_17 = arith.constant 0 : index
    %22 = vector.load %arg8[%c1_15, %c1_16, %c0_17] : memref<18x18x24xf32, #tpu.memory_space<vmem>>, vector<16x16x24xf32>
    tpu.vector_store %arg8[%c1_15, %c1_16, %c0_17], %21 {strides = array<i32>} : memref<18x18x24xf32, #tpu.memory_space<vmem>>, vector<16x16x24xf32>,
    %c0_18 = arith.constant 0 : index
    %c0_19 = arith.constant 0 : index
    %c0_20 = arith.constant 0 : index
    %23 = vector.load %arg3[%c0_18, %c0_19, %c0_20] : memref<3x3x24xf32, #tpu.memory_space<vmem>>, vector<3x3x24xf32>
    %cst_21 = arith.constant 0.000000e+00 : f32
    %24 = vector.broadcast %cst_21 : f32 to vector<16x16x24xf32>
    %c0_22 = arith.constant 0 : index
    %c0_23 = arith.constant 0 : index
    %c0_24 = arith.constant 0 : index
    %25 = vector.load %arg8[%c0_22, %c0_23, %c0_24] : memref<18x18x24xf32, #tpu.memory_space<vmem>>, vector<16x16x24xf32>
    %26 = vector.extract_strided_slice %23 {offsets = [0, 0, 0], sizes = [1, 1, 24], strides = [1, 1, 1]} : vector<3x3x24xf32> to vector<1x1x24xf32>
    %27 = vector.broadcast %26 : vector<1x1x24xf32> to vector<16x16x24xf32>
    %28 = arith.mulf %25, %27 : vector<16x16x24xf32>
    %29 = arith.addf %24, %28 : vector<16x16x24xf32>
    %c0_25 = arith.constant 0 : index
    %c1_26 = arith.constant 1 : index
    %c0_27 = arith.constant 0 : index
    %30 = vector.load %arg8[%c0_25, %c1_26, %c0_27] : memref<18x18x24xf32, #tpu.memory_space<vmem>>, vector<16x16x24xf32>
    %31 = vector.extract_strided_slice %23 {offsets = [0, 1, 0], sizes = [1, 1, 24], strides = [1, 1, 1]} : vector<3x3x24xf32> to vector<1x1x24xf32>
    %32 = vector.broadcast %31 : vector<1x1x24xf32> to vector<16x16x24xf32>
    %33 = arith.mulf %30, %32 : vector<16x16x24xf32>
    %34 = arith.addf %29, %33 : vector<16x16x24xf32>
    %c0_28 = arith.constant 0 : index
    %c2 = arith.constant 2 : index
    %c0_29 = arith.constant 0 : index
    %35 = vector.load %arg8[%c0_28, %c2, %c0_29] : memref<18x18x24xf32, #tpu.memory_space<vmem>>, vector<16x16x24xf32>
    %36 = vector.extract_strided_slice %23 {offsets = [0, 2, 0], sizes = [1, 1, 24], strides = [1, 1, 1]} : vector<3x3x24xf32> to vector<1x1x24xf32>
    %37 = vector.broadcast %36 : vector<1x1x24xf32> to vector<16x16x24xf32>
    %38 = arith.mulf %35, %37 : vector<16x16x24xf32>
    %39 = arith.addf %34, %38 : vector<16x16x24xf32>
    %c1_30 = arith.constant 1 : index
    %c0_31 = arith.constant 0 : index
    %c0_32 = arith.constant 0 : index
    %40 = vector.load %arg8[%c1_30, %c0_31, %c0_32] : memref<18x18x24xf32, #tpu.memory_space<vmem>>, vector<16x16x24xf32>
    %41 = vector.extract_strided_slice %23 {offsets = [1, 0, 0], sizes = [1, 1, 24], strides = [1, 1, 1]} : vector<3x3x24xf32> to vector<1x1x24xf32>
    %42 = vector.broadcast %41 : vector<1x1x24xf32> to vector<16x16x24xf32>
    %43 = arith.mulf %40, %42 : vector<16x16x24xf32>
    %44 = arith.addf %39, %43 : vector<16x16x24xf32>
    %c1_33 = arith.constant 1 : index
    %c1_34 = arith.constant 1 : index
    %c0_35 = arith.constant 0 : index
    %45 = vector.load %arg8[%c1_33, %c1_34, %c0_35] : memref<18x18x24xf32, #tpu.memory_space<vmem>>, vector<16x16x24xf32>
    %46 = vector.extract_strided_slice %23 {offsets = [1, 1, 0], sizes = [1, 1, 24], strides = [1, 1, 1]} : vector<3x3x24xf32> to vector<1x1x24xf32>
    %47 = vector.broadcast %46 : vector<1x1x24xf32> to vector<16x16x24xf32>
    %48 = arith.mulf %45, %47 : vector<16x16x24xf32>
    %49 = arith.addf %44, %48 : vector<16x16x24xf32>
    %c1_36 = arith.constant 1 : index
    %c2_37 = arith.constant 2 : index
    %c0_38 = arith.constant 0 : index
    %50 = vector.load %arg8[%c1_36, %c2_37, %c0_38] : memref<18x18x24xf32, #tpu.memory_space<vmem>>, vector<16x16x24xf32>
    %51 = vector.extract_strided_slice %23 {offsets = [1, 2, 0], sizes = [1, 1, 24], strides = [1, 1, 1]} : vector<3x3x24xf32> to vector<1x1x24xf32>
    %52 = vector.broadcast %51 : vector<1x1x24xf32> to vector<16x16x24xf32>
    %53 = arith.mulf %50, %52 : vector<16x16x24xf32>
    %54 = arith.addf %49, %53 : vector<16x16x24xf32>
    %c2_39 = arith.constant 2 : index
    %c0_40 = arith.constant 0 : index
    %c0_41 = arith.constant 0 : index
    %55 = vector.load %arg8[%c2_39, %c0_40, %c0_41] : memref<18x18x24xf32, #tpu.memory_space<vmem>>, vector<16x16x24xf32>
    %56 = vector.extract_strided_slice %23 {offsets = [2, 0, 0], sizes = [1, 1, 24], strides = [1, 1, 1]} : vector<3x3x24xf32> to vector<1x1x24xf32>
    %57 = vector.broadcast %56 : vector<1x1x24xf32> to vector<16x16x24xf32>
    %58 = arith.mulf %55, %57 : vector<16x16x24xf32>
    %59 = arith.addf %54, %58 : vector<16x16x24xf32>
    %c2_42 = arith.constant 2 : index
    %c1_43 = arith.constant 1 : index
    %c0_44 = arith.constant 0 : index
    %60 = vector.load %arg8[%c2_42, %c1_43, %c0_44] : memref<18x18x24xf32, #tpu.memory_space<vmem>>, vector<16x16x24xf32>
    %61 = vector.extract_strided_slice %23 {offsets = [2, 1, 0], sizes = [1, 1, 24], strides = [1, 1, 1]} : vector<3x3x24xf32> to vector<1x1x24xf32>
    %62 = vector.broadcast %61 : vector<1x1x24xf32> to vector<16x16x24xf32>
    %63 = arith.mulf %60, %62 : vector<16x16x24xf32>
    %64 = arith.addf %59, %63 : vector<16x16x24xf32>
    %c2_45 = arith.constant 2 : index
    %c2_46 = arith.constant 2 : index
    %c0_47 = arith.constant 0 : index
    %65 = vector.load %arg8[%c2_45, %c2_46, %c0_47] : memref<18x18x24xf32, #tpu.memory_space<vmem>>, vector<16x16x24xf32>
    %66 = vector.extract_strided_slice %23 {offsets = [2, 2, 0], sizes = [1, 1, 24], strides = [1, 1, 1]} : vector<3x3x24xf32> to vector<1x1x24xf32>
    %67 = vector.broadcast %66 : vector<1x1x24xf32> to vector<16x16x24xf32>
    %68 = arith.mulf %65, %67 : vector<16x16x24xf32>
    %69 = arith.addf %64, %68 : vector<16x16x24xf32>
    %70 = vector.shape_cast %1 : vector<1x24xf32> to vector<1x1x24xf32>
    %71 = vector.broadcast %70 : vector<1x1x24xf32> to vector<16x16x24xf32>
    %72 = arith.addf %69, %71 : vector<16x16x24xf32>
    %cst_48 = arith.constant 0.000000e+00 : f32
    %cst_49 = arith.constant 6.000000e+00 : f32
    %73 = vector.broadcast %cst_48 : f32 to vector<16x16x24xf32>
    %74 = arith.maximumf %73, %72 : vector<16x16x24xf32>
    %75 = vector.broadcast %cst_49 : f32 to vector<16x16x24xf32>
    %76 = arith.minimumf %75, %74 : vector<16x16x24xf32>
    %77 = vector.shape_cast %76 : vector<16x16x24xf32> to vector<256x24xf32>
    %c0_50 = arith.constant 0 : index
    %c0_51 = arith.constant 0 : index
    %78 = vector.load %arg4[%c0_50, %c0_51] : memref<4x24xbf16, #tpu.memory_space<vmem>>, vector<4x24xbf16>
    %79 = arith.truncf %77 : vector<256x24xf32> to vector<256x24xbf16>
    %cst_52 = arith.constant dense<0.000000e+00> : vector<4x256xf32>
    %80 = tpu.matmul %78, %79, %cst_52 {dimension_numbers = #tpu.dot_dimension_numbers<[1], [1], [0], [0], [0, 0, 1, 0], [], []>} : vector<4x24xbf16>, vector<256x24xbf16>, vector<4x256xf32> -> vector<4x256xf32>
    %c0_53 = arith.constant 0 : index
    %c0_54 = arith.constant 0 : index
    %81 = vector.load %arg6[%c0_53, %c0_54] : memref<4x1xf32, #tpu.memory_space<vmem>>, vector<4x1xf32>
    %82 = vector.broadcast %81 : vector<4x1xf32> to vector<4x256xf32>
    %83 = arith.addf %80, %82 : vector<4x256xf32>
    %84 = tpu.iota {dimensions = array<i32: 0>} : vector<4x4xi32>
    %85 = tpu.iota {dimensions = array<i32: 1>} : vector<4x4xi32>
    %86 = arith.cmpi eq, %84, %85 : vector<4x4xi32>
    %87 = arith.extui %86 : vector<4x4xi1> to vector<4x4xi32>
    %88 = arith.sitofp %87 : vector<4x4xi32> to vector<4x4xf32>
    %cst_55 = arith.constant dense<0.000000e+00> : vector<4x256xf32>
    %89 = tpu.matmul %88, %4, %cst_55 {dimension_numbers = #tpu.dot_dimension_numbers<[1], [1], [0], [0], [0, 0, 1, 0], [], []>} : vector<4x4xf32>, vector<256x4xf32>, vector<4x256xf32> -> vector<4x256xf32>
    %90 = arith.addf %83, %89 : vector<4x256xf32>
    %91 = vector.shape_cast %90 : vector<4x256xf32> to vector<1x4x256xf32>
    %c0_56 = arith.constant 0 : index
    %c0_57 = arith.constant 0 : index
    %c0_58 = arith.constant 0 : index
    %92 = vector.load %arg7[%c0_56, %c0_57, %c0_58] : memref<1x4x256xf32, #tpu.memory_space<vmem>>, vector<1x4x256xf32>
    tpu.vector_store %arg7[%c0_56, %c0_57, %c0_58], %91 {strides = array<i32>} : memref<1x4x256xf32, #tpu.memory_space<vmem>>, vector<1x4x256xf32>,
    return
  }
  func.func @transform_0(%arg0: i32) -> (i32, i32, i32, i32) {
    %c0_i32 = arith.constant 0 : i32
    %c0_i32_0 = arith.constant 0 : i32
    %c0_i32_1 = arith.constant 0 : i32
    %c0_i32_2 = arith.constant 0 : i32
    return %arg0, %c0_i32, %c0_i32_0, %c0_i32_1 : i32, i32, i32, i32
  }
  func.func @transform_1(%arg0: i32) -> (i32, i32) {
    %c0_i32 = arith.constant 0 : i32
    %c0_i32_0 = arith.constant 0 : i32
    %c0_i32_1 = arith.constant 0 : i32
    return %c0_i32, %c0_i32_0 : i32, i32
  }
  func.func @transform_2(%arg0: i32) -> (i32, i32, i32) {
    %c0_i32 = arith.constant 0 : i32
    %c0_i32_0 = arith.constant 0 : i32
    %c0_i32_1 = arith.constant 0 : i32
    %c0_i32_2 = arith.constant 0 : i32
    return %c0_i32, %c0_i32_0, %c0_i32_1 : i32, i32, i32
  }
  func.func @transform_3(%arg0: i32) -> (i32, i32) {
    %c0_i32 = arith.constant 0 : i32
    %c0_i32_0 = arith.constant 0 : i32
    %c0_i32_1 = arith.constant 0 : i32
    return %c0_i32, %c0_i32_0 : i32, i32
  }
  func.func @transform_4(%arg0: i32) -> (i32, i32) {
    %c0_i32 = arith.constant 0 : i32
    %c0_i32_0 = arith.constant 0 : i32
    %c0_i32_1 = arith.constant 0 : i32
    return %c0_i32, %c0_i32_0 : i32, i32
  }
  func.func @transform_5(%arg0: i32) -> (i32, i32) {
    %c0_i32 = arith.constant 0 : i32
    %c0_i32_0 = arith.constant 0 : i32
    %c0_i32_1 = arith.constant 0 : i32
    return %c0_i32, %c0_i32_0 : i32, i32
  }
  func.func @transform_6(%arg0: i32) -> (i32, i32, i32) {
    %c0_i32 = arith.constant 0 : i32
    %c0_i32_0 = arith.constant 0 : i32
    %c0_i32_1 = arith.constant 0 : i32
    return %arg0, %c0_i32, %c0_i32_0 : i32, i32, i32
  }
}

</mosaic_0001>

<llo_original>
// kernel: inverted_residual_forward.1
$region0: #{inverted_residual_forward.1}
  #allocation0 [shape = 'u32[]', space=smem, size = 0x4, offset = 0x4, fixed_abs, tag = 'smem constant byte address 0x4 - core index']
  #allocation1 [shape = 'u32[72,128]{1,0:T(1,128)}', space=vmem, size = 0x9000, scoped, tag = 'internal scratch']
  #allocation2 [shape = 'f32[18,18,24]{2,1,0:T(8,128)}', space=vmem, size = 0x36000, scoped, tag = 'scratch operand']
  %s0 = inlined_call_operand.vmem [shape: f32[2,16,16,4], index: 0, kind: input, shape index: {}]
  %s1 = inlined_call_operand.vmem [shape: bf16[4,24], index: 1, kind: input, shape index: {}]
  %s2 = inlined_call_operand.vmem [shape: f32[3,3,24], index: 2, kind: input, shape index: {}]
  %s3 = inlined_call_operand.vmem [shape: bf16[4,24], index: 3, kind: input, shape index: {}]
  %s4 = inlined_call_operand.vmem [shape: f32[2,24], index: 4, kind: input, shape index: {}]
  %s5 = inlined_call_operand.vmem [shape: f32[4,1], index: 5, kind: input, shape index: {}]
  %s6 = inlined_call_operand.vmem [shape: f32[2,4,256], index: 6, kind: output, shape index: {}]
  %s7 = sld [smem:[#allocation0]]
  $region57: #{inverted_residual_forward.1} parent=0
    _
  %s9 = ssub.s32 1, %s7
  %s10 = scalar_select 0, %s9, %s7
  loop: start=0, step=1, limit=4
  $region2: #{inverted_residual_forward.1} parent=0 // loop_pre_header
    _
  $region3: #{inverted_residual_forward.1} parent=0 // loop_header
    %s12 = sphi 0, %s16
    %p13 = scmp.ge.s32.totalorder %s12, 4
    %s22 = sphi 0, %s24
    %s25 = sphi 0, %s22
    %s26 = sphi 0, %s25
    %s42 = sphi 0, %s26
    %s46 = sphi 0, %s46
    %s48 = sphi 0, %s46
    %s49 = sphi 0, %s48
    %s63 = sphi 0, %s49
    %s67 = sphi 0, %s67
    %s69 = sphi 0, %s67
    %s70 = sphi 0, %s69
    %s84 = sphi 0, %s70
    %s88 = sphi 0, %s88
    %s90 = sphi 0, %s88
    %s91 = sphi 0, %s90
    %s105 = sphi 0, %s91
    %s109 = sphi 0, %s109
    %s111 = sphi 0, %s109
    %s112 = sphi 0, %s111
    %s126 = sphi 0, %s112
    %s130 = sphi 0, %s130
    %s132 = sphi 0, %s130
    %s133 = sphi 0, %s132
    %s147 = sphi 0, %s133
    %s153 = sphi 0, %s155
    %s156 = sphi 0, %s153
    %s157 = sphi 0, %s156
    %s173 = sphi 0, %s157
  $region4: #{inverted_residual_forward.1} parent=0 // loop_header_branch
    %15 = sbr.rel (%p13) target = $region8
  $region5: #{inverted_residual_forward.1} parent=0 // loop_body
    %s17 = ssub.s32 %s12, 1
    %s18 = ssub.s32 %s12, 2
    %s19 = sadd.s32 %s12, 1
    %s20 = ssub.s32 %s12, %s19
    %p21 = scmp.eq.s32.totalorder %s20, 0
    %s23 = sadd.s32 %s22, 1
    %s24 = scalar_select %p21, %s22, %s23
    %p27 = pneg %p21
    %p28 = scmp.eq.s32.totalorder %s12, 1
    %p29 = por %p27, %p28
    %p30 = scmp.ne.s32.totalorder %s22, %s25
    %p31 = scmp.eq.s32.totalorder %s12, 0
    %p32 = por %p30, %p31
    %p33 = scmp.ne.s32.totalorder %s22, %s25
    %p34 = scmp.eq.s32.totalorder %s17, 1
    %p35 = por %p33, %p34
    %p36 = scmp.ne.s32.totalorder %s25, %s26
    %p37 = scmp.eq.s32.totalorder %s17, 0
    %p38 = por %p36, %p37
    %p39 = scmp.ne.s32.totalorder %s25, %s26
    %p40 = scmp.eq.s32.totalorder %s18, 1
    %p41 = por %p39, %p40
    %p43 = scmp.ne.s32.totalorder %s26, %s42
    %p44 = scmp.eq.s32.totalorder %s18, 0
    %p45 = por %p43, %p44
    %s47 = sadd.s32 %s46, 1
    %p50 = scmp.eq.s32.totalorder %s12, 1
    %p51 = scmp.ne.s32.totalorder %s46, %s48
    %p52 = scmp.eq.s32.totalorder %s12, 0
    %p53 = por %p51, %p52
    %p54 = scmp.ne.s32.totalorder %s46, %s48
    %p55 = scmp.eq.s32.totalorder %s17, 1
    %p56 = por %p54, %p55
    %p57 = scmp.ne.s32.totalorder %s48, %s49
    %p58 = scmp.eq.s32.totalorder %s17, 0
    %p59 = por %p57, %p58
    %p60 = scmp.ne.s32.totalorder %s48, %s49
    %p61 = scmp.eq.s32.totalorder %s18, 1
    %p62 = por %p60, %p61
    %p64 = scmp.ne.s32.totalorder %s49, %s63
    %p65 = scmp.eq.s32.totalorder %s18, 0
    %p66 = por %p64, %p65
    %s68 = sadd.s32 %s67, 1
    %p71 = scmp.eq.s32.totalorder %s12, 1
    %p72 = scmp.ne.s32.totalorder %s67, %s69
    %p73 = scmp.eq.s32.totalorder %s12, 0
    %p74 = por %p72, %p73
    %p75 = scmp.ne.s32.totalorder %s67, %s69
    %p76 = scmp.eq.s32.totalorder %s17, 1
    %p77 = por %p75, %p76
    %p78 = scmp.ne.s32.totalorder %s69, %s70
    %p79 = scmp.eq.s32.totalorder %s17, 0
    %p80 = por %p78, %p79
    %p81 = scmp.ne.s32.totalorder %s69, %s70
    %p82 = scmp.eq.s32.totalorder %s18, 1
    %p83 = por %p81, %p82
    %p85 = scmp.ne.s32.totalorder %s70, %s84
    %p86 = scmp.eq.s32.totalorder %s18, 0
    %p87 = por %p85, %p86
    %s89 = sadd.s32 %s88, 1
    %p92 = scmp.eq.s32.totalorder %s12, 1
    %p93 = scmp.ne.s32.totalorder %s88, %s90
    %p94 = scmp.eq.s32.totalorder %s12, 0
    %p95 = por %p93, %p94
    %p96 = scmp.ne.s32.totalorder %s88, %s90
    %p97 = scmp.eq.s32.totalorder %s17, 1
    %p98 = por %p96, %p97
    %p99 = scmp.ne.s32.totalorder %s90, %s91
    %p100 = scmp.eq.s32.totalorder %s17, 0
    %p101 = por %p99, %p100
    %p102 = scmp.ne.s32.totalorder %s90, %s91
    %p103 = scmp.eq.s32.totalorder %s18, 1
    %p104 = por %p102, %p103
    %p106 = scmp.ne.s32.totalorder %s91, %s105
    %p107 = scmp.eq.s32.totalorder %s18, 0
    %p108 = por %p106, %p107
    %s110 = sadd.s32 %s109, 1
    %p113 = scmp.eq.s32.totalorder %s12, 1
    %p114 = scmp.ne.s32.totalorder %s109, %s111
    %p115 = scmp.eq.s32.totalorder %s12, 0
    %p116 = por %p114, %p115
    %p117 = scmp.ne.s32.totalorder %s109, %s111
    %p118 = scmp.eq.s32.totalorder %s17, 1
    %p119 = por %p117, %p118
    %p120 = scmp.ne.s32.totalorder %s111, %s112
    %p121 = scmp.eq.s32.totalorder %s17, 0
    %p122 = por %p120, %p121
    %p123 = scmp.ne.s32.totalorder %s111, %s112
    %p124 = scmp.eq.s32.totalorder %s18, 1
    %p125 = por %p123, %p124
    %p127 = scmp.ne.s32.totalorder %s112, %s126
    %p128 = scmp.eq.s32.totalorder %s18, 0
    %p129 = por %p127, %p128
    %s131 = sadd.s32 %s130, 1
    %p134 = scmp.eq.s32.totalorder %s12, 1
    %p135 = scmp.ne.s32.totalorder %s130, %s132
    %p136 = scmp.eq.s32.totalorder %s12, 0
    %p137 = por %p135, %p136
    %p138 = scmp.ne.s32.totalorder %s130, %s132
    %p139 = scmp.eq.s32.totalorder %s17, 1
    %p140 = por %p138, %p139
    %p141 = scmp.ne.s32.totalorder %s132, %s133
    %p142 = scmp.eq.s32.totalorder %s17, 0
    %p143 = por %p141, %p142
    %p144 = scmp.ne.s32.totalorder %s132, %s133
    %p145 = scmp.eq.s32.totalorder %s18, 1
    %p146 = por %p144, %p145
    %p148 = scmp.ne.s32.totalorder %s133, %s147
    %p149 = scmp.eq.s32.totalorder %s18, 0
    %p150 = por %p148, %p149
    %s151 = ssub.s32 %s12, %s19
    %p152 = scmp.eq.s32.totalorder %s151, 0
    %s154 = sadd.s32 %s153, 1
    %s155 = scalar_select %p152, %s153, %s154
    %p158 = pneg %p152
    %p159 = scmp.eq.s32.totalorder %s12, 1
    %p160 = por %p158, %p159
    %p161 = scmp.ne.s32.totalorder %s153, %s156
    %p162 = scmp.eq.s32.totalorder %s12, 0
    %p163 = por %p161, %p162
    %p164 = scmp.ne.s32.totalorder %s153, %s156
    %p165 = scmp.eq.s32.totalorder %s17, 1
    %p166 = por %p164, %p165
    %p167 = scmp.ne.s32.totalorder %s156, %s157
    %p168 = scmp.eq.s32.totalorder %s17, 0
    %p169 = por %p167, %p168
    %p170 = scmp.ne.s32.totalorder %s156, %s157
    %p171 = scmp.eq.s32.totalorder %s18, 1
    %p172 = por %p170, %p171
    %p174 = scmp.ne.s32.totalorder %s157, %s173
    %p175 = scmp.eq.s32.totalorder %s18, 0
    %p176 = por %p174, %p175
    %p177 = scmp.le.s32.totalorder 1, %s12
    %p178 = scmp.lt.s32.totalorder %s12, 3
    %p179 = pnand %p177, %p178
    %p180 = pneg %p179
    // Predicated region
    $region9: #{inverted_residual_forward.1} parent=5 // pred_check
      _
    $region10: #{inverted_residual_forward.1} parent=5 // pred_check_branch
      %182 = sbr.rel (%p179) target = $region12
    $region11: #{inverted_residual_forward.1} parent=5 // pred_region
      %s183 = ssub.s32 %s12, 1
      // Predicated region
      $region13: #{inverted_residual_forward.1} parent=11 // pred_check
        %p184 = pneg %p59
      $region14: #{inverted_residual_forward.1} parent=11 // pred_check_branch
        %186 = sbr.rel (%p184) target = $region16
      $region15: #{inverted_residual_forward.1} parent=11 // pred_region
        _
      $region16: #{inverted_residual_forward.1} parent=11 // pred_fallthru
        _
      // Predicated region
      $region17: #{inverted_residual_forward.1} parent=11 // pred_check
        %p187 = pneg %p80
      $region18: #{inverted_residual_forward.1} parent=11 // pred_check_branch
        %189 = sbr.rel (%p187) target = $region20
      $region19: #{inverted_residual_forward.1} parent=11 // pred_region
        _
      $region20: #{inverted_residual_forward.1} parent=11 // pred_fallthru
        _
      // Predicated region
      $region21: #{inverted_residual_forward.1} parent=11 // pred_check
        %p190 = pneg %p101
      $region22: #{inverted_residual_forward.1} parent=11 // pred_check_branch
        %192 = sbr.rel (%p190) target = $region24
      $region23: #{inverted_residual_forward.1} parent=11 // pred_region
        _
      $region24: #{inverted_residual_forward.1} parent=11 // pred_fallthru
        _
      // Predicated region
      $region25: #{inverted_residual_forward.1} parent=11 // pred_check
        %p193 = pneg %p122
      $region26: #{inverted_residual_forward.1} parent=11 // pred_check_branch
        %195 = sbr.rel (%p193) target = $region28
      $region27: #{inverted_residual_forward.1} parent=11 // pred_region
        _
      $region28: #{inverted_residual_forward.1} parent=11 // pred_fallthru
        _
      // Predicated region
      $region29: #{inverted_residual_forward.1} parent=11 // pred_check
        %p196 = pneg %p143
      $region30: #{inverted_residual_forward.1} parent=11 // pred_check_branch
        %198 = sbr.rel (%p196) target = $region32
      $region31: #{inverted_residual_forward.1} parent=11 // pred_region
        _
      $region32: #{inverted_residual_forward.1} parent=11 // pred_fallthru
        _
    $region12: #{inverted_residual_forward.1} parent=5 // pred_fallthru
      _
    %p199 = scmp.lt.s32.totalorder %s12, 2
    // Predicated region
    $region33: #{inverted_residual_forward.1} parent=5 // pred_check
      %p200 = pneg %p199
    $region34: #{inverted_residual_forward.1} parent=5 // pred_check_branch
      %202 = sbr.rel (%p200) target = $region36
    $region35: #{inverted_residual_forward.1} parent=5 // pred_region
      // Predicated region
      $region37: #{inverted_residual_forward.1} parent=35 // pred_check
        %p203 = pneg %p32
      $region38: #{inverted_residual_forward.1} parent=35 // pred_check_branch
        %205 = sbr.rel (%p203) target = $region40
      $region39: #{inverted_residual_forward.1} parent=35 // pred_region
        %p206 = scmp.lt.s32.totalorder %s12, 1
        %s207 = scalar_select %p206, %s12, 1
        %s208 = smul.addr %s207, 32
        %s209 = smul.addr %s208, 8
        %s210 = scalar_lea.vmem %s0, %s209
      $region40: #{inverted_residual_forward.1} parent=35 // pred_fallthru
        _
    $region36: #{inverted_residual_forward.1} parent=5 // pred_fallthru
      _
    %p211 = scmp.le.s32.totalorder 1, %s12
    %p212 = scmp.lt.s32.totalorder %s12, 3
    %p213 = pnand %p211, %p212
    %p214 = pneg %p213
    // Predicated region
    $region41: #{inverted_residual_forward.1} parent=5 // pred_check
      _
    $region42: #{inverted_residual_forward.1} parent=5 // pred_check_branch
      %216 = sbr.rel (%p213) target = $region44
    $region43: #{inverted_residual_forward.1} parent=5 // pred_region
      %s217 = ssub.s32 %s12, 1
      %p218 = scmp.lt.s32.totalorder %s17, 1
      %s219 = scalar_select %p218, %s17, 1
      %s220 = smul.addr %s219, 32
      %s221 = smul.addr %s220, 8
      %s222 = scalar_lea.vmem %s0, %s221
      %p223 = pneg %p38
      %p224 = pneg %p35
      %p225 = pneg %p59
      %p226 = pneg %p56
      %p227 = pneg %p80
      %p228 = pneg %p77
      %p229 = pneg %p101
      %p230 = pneg %p98
      %p231 = pneg %p122
      %p232 = pneg %p119
      %p233 = pneg %p143
      %p234 = pneg %p140
      %p235 = pneg %p169
      %p236 = pneg %p166
      %p237 = scmp.lt.s32.totalorder %s17, 1
      %s238 = scalar_select %p237, %s17, 1
      %s239 = smul.addr %s238, 2
      %s240 = smul.addr %s239, 4
      %s241 = scalar_lea.vmem %s6, %s240
      %p242 = scmp.lt.s32.totalorder %s17, 1
      %s243 = scalar_select %p242, %s17, 1
      %s244 = smul.addr %s243, 32
      %s245 = smul.addr %s244, 8
      %s246 = scalar_lea.vmem %s0, %s245
      %p247 = scmp.lt.s32.totalorder %s17, 1
      %s248 = scalar_select %p247, %s17, 1
      %s249 = smul.addr %s248, 2
      %s250 = smul.addr %s249, 4
      %s251 = scalar_lea.vmem %s6, %s250
      %v253 = vld [vmem:[%s4] sm:$0x1]
      %v254 = vld [vmem:[%s4 + $0x1] sm:$0x1]
      %v255 = vld [vmem:[%s246] sm:$0xff]
      %v256 = vld [vmem:[%s246 + $0x8] sm:$0xff]
      %v257 = vld [vmem:[%s246 + $0x10] sm:$0xff]
      %v258 = vld [vmem:[%s246 + $0x18] sm:$0xff]
      %v259 = vld [vmem:[%s246 + $0x20] sm:$0xff]
      %v260 = vld [vmem:[%s246 + $0x28] sm:$0xff]
      %v261 = vld [vmem:[%s246 + $0x30] sm:$0xff]
      %v262 = vld [vmem:[%s246 + $0x38] sm:$0xff]
      %v263 = vld [vmem:[%s246 + $0x40] sm:$0xff]
      %v264 = vld [vmem:[%s246 + $0x48] sm:$0xff]
      %v265 = vld [vmem:[%s246 + $0x50] sm:$0xff]
      %v266 = vld [vmem:[%s246 + $0x58] sm:$0xff]
      %v267 = vld [vmem:[%s246 + $0x60] sm:$0xff]
      %v268 = vld [vmem:[%s246 + $0x68] sm:$0xff]
      %v269 = vld [vmem:[%s246 + $0x70] sm:$0xff]
      %v270 = vld [vmem:[%s246 + $0x78] sm:$0xff]
      %v271 = vld [vmem:[%s246 + $0x80] sm:$0xff]
      %v272 = vld [vmem:[%s246 + $0x88] sm:$0xff]
      %v273 = vld [vmem:[%s246 + $0x90] sm:$0xff]
      %v274 = vld [vmem:[%s246 + $0x98] sm:$0xff]
      %v275 = vld [vmem:[%s246 + $0xa0] sm:$0xff]
      %v276 = vld [vmem:[%s246 + $0xa8] sm:$0xff]
      %v277 = vld [vmem:[%s246 + $0xb0] sm:$0xff]
      %v278 = vld [vmem:[%s246 + $0xb8] sm:$0xff]
      %v279 = vld [vmem:[%s246 + $0xc0] sm:$0xff]
      %v280 = vld [vmem:[%s246 + $0xc8] sm:$0xff]
      %v281 = vld [vmem:[%s246 + $0xd0] sm:$0xff]
      %v282 = vld [vmem:[%s246 + $0xd8] sm:$0xff]
      %v283 = vld [vmem:[%s246 + $0xe0] sm:$0xff]
      %v284 = vld [vmem:[%s246 + $0xe8] sm:$0xff]
      %v285 = vld [vmem:[%s246 + $0xf0] sm:$0xff]
      %v286 = vld [vmem:[%s246 + $0xf8] sm:$0xff]
      %v287 = vpack.c.bf16 %v256, %v255
      %v288 = vpack.c.bf16 %v258, %v257
      %v289 = vpack.c.bf16 %v260, %v259
      %v290 = vpack.c.bf16 %v262, %v261
      %v291 = vpack.c.bf16 %v264, %v263
      %v292 = vpack.c.bf16 %v266, %v265
      %v293 = vpack.c.bf16 %v268, %v267
      %v294 = vpack.c.bf16 %v270, %v269
      %v295 = vpack.c.bf16 %v272, %v271
      %v296 = vpack.c.bf16 %v274, %v273
      %v297 = vpack.c.bf16 %v276, %v275
      %v298 = vpack.c.bf16 %v278, %v277
      %v299 = vpack.c.bf16 %v280, %v279
      %v300 = vpack.c.bf16 %v282, %v281
      %v301 = vpack.c.bf16 %v284, %v283
      %v302 = vpack.c.bf16 %v286, %v285
      %v303 = vld [vmem:[%s1] sm:$0x3]
      %v304 = vperm.slane %v253, 0
      %vm305 = vcmask 31744
      %v307 = vsel %vm305, %v287, 0
      %v310 = vsel %vm305, %v288, 0
      %v313 = vsel %vm305, %v289, 0
      %v316 = vsel %vm305, %v290, 0
      %v319 = vsel %vm305, %v291, 0
      %v322 = vsel %vm305, %v292, 0
      %v325 = vsel %vm305, %v293, 0
      %v328 = vsel %vm305, %v294, 0
      %v331 = vsel %vm305, %v295, 0
      %v334 = vsel %vm305, %v296, 0
      %v337 = vsel %vm305, %v297, 0
      %v340 = vsel %vm305, %v298, 0
      %v343 = vsel %vm305, %v299, 0
      %v346 = vsel %vm305, %v300, 0
      %v349 = vsel %vm305, %v301, 0
      %v352 = vsel %vm305, %v302, 0
      %vm354 = vcmask 1041408
      %v356 = vsel %vm354, %v303, 0
      %358 = vmatpush.bf16.msra.mxu0 0
      %359 = vmatpush.bf16.msra.mxu0 0
      %360 = vmatpush.bf16.msra.mxu0 0
      %361 = vmatpush.bf16.msra.mxu0 0
      %362 = vmatpush.bf16.msra.mxu0 0
      %363 = vmatpush.bf16.msra.mxu0 0
      %364 = vmatpush.bf16.msra.mxu0 0
      %365 = vmatpush.bf16.msra.mxu0 %v356
      %366 = vmatmul.bf16.gmra.mxu0 %v307
      %v367 = vpop.f32.mrf.mxu0
      %v368 = vadd.f32 %v304, %v367
      %v369 = vpop.f32.mrf.mxu0
      %v370 = vadd.f32 %v304, %v369
      %371 = vmatmul.bf16.gmra.mxu0 %v310
      %v372 = vpop.f32.mrf.mxu0
      %v373 = vadd.f32 %v304, %v372
      %v374 = vpop.f32.mrf.mxu0
      %v375 = vadd.f32 %v304, %v374
      %376 = vmatmul.bf16.gmra.mxu0 %v313
      %v377 = vpop.f32.mrf.mxu0
      %v378 = vadd.f32 %v304, %v377
      %v379 = vpop.f32.mrf.mxu0
      %v380 = vadd.f32 %v304, %v379
      %381 = vmatmul.bf16.gmra.mxu0 %v316
      %v382 = vpop.f32.mrf.mxu0
      %v383 = vadd.f32 %v304, %v382
      %v384 = vpop.f32.mrf.mxu0
      %v385 = vadd.f32 %v304, %v384
      %386 = vmatmul.bf16.gmra.mxu0 %v319
      %v387 = vpop.f32.mrf.mxu0
      %v388 = vadd.f32 %v304, %v387
      %v389 = vpop.f32.mrf.mxu0
      %v390 = vadd.f32 %v304, %v389
      %391 = vmatmul.bf16.gmra.mxu0 %v322
      %v392 = vpop.f32.mrf.mxu0
      %v393 = vadd.f32 %v304, %v392
      %v394 = vpop.f32.mrf.mxu0
      %v395 = vadd.f32 %v304, %v394
      %396 = vmatmul.bf16.gmra.mxu0 %v325
      %v397 = vpop.f32.mrf.mxu0
      %v398 = vadd.f32 %v304, %v397
      %v399 = vpop.f32.mrf.mxu0
      %v400 = vadd.f32 %v304, %v399
      %401 = vmatmul.bf16.gmra.mxu0 %v328
      %v402 = vpop.f32.mrf.mxu0
      %v403 = vadd.f32 %v304, %v402
      %v404 = vpop.f32.mrf.mxu0
      %v405 = vadd.f32 %v304, %v404
      %406 = vmatmul.bf16.gmra.mxu0 %v331
      %v407 = vpop.f32.mrf.mxu0
      %v408 = vadd.f32 %v304, %v407
      %v409 = vpop.f32.mrf.mxu0
      %v410 = vadd.f32 %v304, %v409
      %411 = vmatmul.bf16.gmra.mxu0 %v334
      %v412 = vpop.f32.mrf.mxu0
      %v413 = vadd.f32 %v304, %v412
      %v414 = vpop.f32.mrf.mxu0
      %v415 = vadd.f32 %v304, %v414
      %416 = vmatmul.bf16.gmra.mxu0 %v337
      %v417 = vpop.f32.mrf.mxu0
      %v418 = vadd.f32 %v304, %v417
      %v419 = vpop.f32.mrf.mxu0
      %v420 = vadd.f32 %v304, %v419
      %421 = vmatmul.bf16.gmra.mxu0 %v340
      %v422 = vpop.f32.mrf.mxu0
      %v423 = vadd.f32 %v304, %v422
      %v424 = vpop.f32.mrf.mxu0
      %v425 = vadd.f32 %v304, %v424
      %426 = vmatmul.bf16.gmra.mxu0 %v343
      %v427 = vpop.f32.mrf.mxu0
      %v428 = vadd.f32 %v304, %v427
      %v429 = vpop.f32.mrf.mxu0
      %v430 = vadd.f32 %v304, %v429
      %431 = vmatmul.bf16.gmra.mxu0 %v346
      %v432 = vpop.f32.mrf.mxu0
      %v433 = vadd.f32 %v304, %v432
      %v434 = vpop.f32.mrf.mxu0
      %v435 = vadd.f32 %v304, %v434
      %436 = vmatmul.bf16.gmra.mxu0 %v349
      %v437 = vpop.f32.mrf.mxu0
      %v438 = vadd.f32 %v304, %v437
      %v439 = vpop.f32.mrf.mxu0
      %v440 = vadd.f32 %v304, %v439
      %441 = vmatmul.bf16.gmra.mxu0 %v352
      %v442 = vpop.f32.mrf.mxu0
      %v443 = vadd.f32 %v304, %v442
      %v444 = vpop.f32.mrf.mxu0
      %v445 = vadd.f32 %v304, %v444
      %446 = vdwg.mxu0
      %v447 = vmax.f32 %v368, 0.0
      %v448 = vmax.f32 %v370, 0.0
      %v449 = vmax.f32 %v373, 0.0
      %v450 = vmax.f32 %v375, 0.0
      %v451 = vmax.f32 %v378, 0.0
      %v452 = vmax.f32 %v380, 0.0
      %v453 = vmax.f32 %v383, 0.0
      %v454 = vmax.f32 %v385, 0.0
      %v455 = vmax.f32 %v388, 0.0
      %v456 = vmax.f32 %v390, 0.0
      %v457 = vmax.f32 %v393, 0.0
      %v458 = vmax.f32 %v395, 0.0
      %v459 = vmax.f32 %v398, 0.0
      %v460 = vmax.f32 %v400, 0.0
      %v461 = vmax.f32 %v403, 0.0
      %v462 = vmax.f32 %v405, 0.0
      %v463 = vmax.f32 %v408, 0.0
      %v464 = vmax.f32 %v410, 0.0
      %v465 = vmax.f32 %v413, 0.0
      %v466 = vmax.f32 %v415, 0.0
      %v467 = vmax.f32 %v418, 0.0
      %v468 = vmax.f32 %v420, 0.0
      %v469 = vmax.f32 %v423, 0.0
      %v470 = vmax.f32 %v425, 0.0
      %v471 = vmax.f32 %v428, 0.0
      %v472 = vmax.f32 %v430, 0.0
      %v473 = vmax.f32 %v433, 0.0
      %v474 = vmax.f32 %v435, 0.0
      %v475 = vmax.f32 %v438, 0.0
      %v476 = vmax.f32 %v440, 0.0
      %v477 = vmax.f32 %v443, 0.0
      %v478 = vmax.f32 %v445, 0.0
      %v479 = vmin.f32 %v447, 6.0
      %v480 = vmin.f32 %v448, 6.0
      %v481 = vmin.f32 %v449, 6.0
      %v482 = vmin.f32 %v450, 6.0
      %v483 = vmin.f32 %v451, 6.0
      %v484 = vmin.f32 %v452, 6.0
      %v485 = vmin.f32 %v453, 6.0
      %v486 = vmin.f32 %v454, 6.0
      %v487 = vmin.f32 %v455, 6.0
      %v488 = vmin.f32 %v456, 6.0
      %v489 = vmin.f32 %v457, 6.0
      %v490 = vmin.f32 %v458, 6.0
      %v491 = vmin.f32 %v459, 6.0
      %v492 = vmin.f32 %v460, 6.0
      %v493 = vmin.f32 %v461, 6.0
      %v494 = vmin.f32 %v462, 6.0
      %v495 = vmin.f32 %v463, 6.0
      %v496 = vmin.f32 %v464, 6.0
      %v497 = vmin.f32 %v465, 6.0
      %v498 = vmin.f32 %v466, 6.0
      %v499 = vmin.f32 %v467, 6.0
      %v500 = vmin.f32 %v468, 6.0
      %v501 = vmin.f32 %v469, 6.0
      %v502 = vmin.f32 %v470, 6.0
      %v503 = vmin.f32 %v471, 6.0
      %v504 = vmin.f32 %v472, 6.0
      %v505 = vmin.f32 %v473, 6.0
      %v506 = vmin.f32 %v474, 6.0
      %v507 = vmin.f32 %v475, 6.0
      %v508 = vmin.f32 %v476, 6.0
      %v509 = vmin.f32 %v477, 6.0
      %v510 = vmin.f32 %v478, 6.0
      %v511 = vmax.f32 %v253, 0.0
      %v512 = vmin.f32 %v511, 6.0
      %v513 = vperm.slane %v512, 0
      %vm514 = vcmask 195584
      %515 = vst.msk [vmem:[#allocation2] sm:$0xff] %vm514, %v513
      %516 = vst.msk [vmem:[#allocation2 + $0x8] sm:$0xff] %vm514, %v513
      %vm517 = vcmask 189440
      %518 = vst.msk [vmem:[#allocation2 + $0x10] sm:$0x3] %vm517, %v513
      %519 = vst.msk [vmem:[#allocation2 + $0x18] sm:$0xff] %vm514, %v513
      %520 = vst.msk [vmem:[#allocation2 + $0x20] sm:$0xff] %vm514, %v513
      %521 = vst.msk [vmem:[#allocation2 + $0x28] sm:$0x3] %vm517, %v513
      %522 = vst.msk [vmem:[#allocation2 + $0x30] sm:$0xff] %vm514, %v513
      %523 = vst.msk [vmem:[#allocation2 + $0x38] sm:$0xff] %vm514, %v513
      %524 = vst.msk [vmem:[#allocation2 + $0x40] sm:$0x3] %vm517, %v513
      %525 = vst.msk [vmem:[#allocation2 + $0x48] sm:$0xff] %vm514, %v513
      %526 = vst.msk [vmem:[#allocation2 + $0x50] sm:$0xff] %vm514, %v513
      %527 = vst.msk [vmem:[#allocation2 + $0x58] sm:$0x3] %vm517, %v513
      %528 = vst.msk [vmem:[#allocation2 + $0x60] sm:$0xff] %vm514, %v513
      %529 = vst.msk [vmem:[#allocation2 + $0x68] sm:$0xff] %vm514, %v513
      %530 = vst.msk [vmem:[#allocation2 + $0x70] sm:$0x3] %vm517, %v513
      %531 = vst.msk [vmem:[#allocation2 + $0x78] sm:$0xff] %vm514, %v513
      %532 = vst.msk [vmem:[#allocation2 + $0x80] sm:$0xff] %vm514, %v513
      %533 = vst.msk [vmem:[#allocation2 + $0x88] sm:$0x3] %vm517, %v513
      %534 = vst.msk [vmem:[#allocation2 + $0x90] sm:$0xff] %vm514, %v513
      %535 = vst.msk [vmem:[#allocation2 + $0x98] sm:$0xff] %vm514, %v513
      %536 = vst.msk [vmem:[#allocation2 + $0xa0] sm:$0x3] %vm517, %v513
      %537 = vst.msk [vmem:[#allocation2 + $0xa8] sm:$0xff] %vm514, %v513
      %538 = vst.msk [vmem:[#allocation2 + $0xb0] sm:$0xff] %vm514, %v513
      %539 = vst.msk [vmem:[#allocation2 + $0xb8] sm:$0x3] %vm517, %v513
      %540 = vst.msk [vmem:[#allocation2 + $0xc0] sm:$0xff] %vm514, %v513
      %541 = vst.msk [vmem:[#allocation2 + $0xc8] sm:$0xff] %vm514, %v513
      %542 = vst.msk [vmem:[#allocation2 + $0xd0] sm:$0x3] %vm517, %v513
      %543 = vst.msk [vmem:[#allocation2 + $0xd8] sm:$0xff] %vm514, %v513
      %544 = vst.msk [vmem:[#allocation2 + $0xe0] sm:$0xff] %vm514, %v513
      %545 = vst.msk [vmem:[#allocation2 + $0xe8] sm:$0x3] %vm517, %v513
      %546 = vst.msk [vmem:[#allocation2 + $0xf0] sm:$0xff] %vm514, %v513
      %547 = vst.msk [vmem:[#allocation2 + $0xf8] sm:$0xff] %vm514, %v513
      %548 = vst.msk [vmem:[#allocation2 + $0x100] sm:$0x3] %vm517, %v513
      %549 = vst.msk [vmem:[#allocation2 + $0x108] sm:$0xff] %vm514, %v513
      %550 = vst.msk [vmem:[#allocation2 + $0x110] sm:$0xff] %vm514, %v513
      %551 = vst.msk [vmem:[#allocation2 + $0x118] sm:$0x3] %vm517, %v513
      %552 = vst.msk [vmem:[#allocation2 + $0x120] sm:$0xff] %vm514, %v513
      %553 = vst.msk [vmem:[#allocation2 + $0x128] sm:$0xff] %vm514, %v513
      %554 = vst.msk [vmem:[#allocation2 + $0x130] sm:$0x3] %vm517, %v513
      %555 = vst.msk [vmem:[#allocation2 + $0x138] sm:$0xff] %vm514, %v513
      %556 = vst.msk [vmem:[#allocation2 + $0x140] sm:$0xff] %vm514, %v513
      %557 = vst.msk [vmem:[#allocation2 + $0x148] sm:$0x3] %vm517, %v513
      %558 = vst.msk [vmem:[#allocation2 + $0x150] sm:$0xff] %vm514, %v513
      %559 = vst.msk [vmem:[#allocation2 + $0x158] sm:$0xff] %vm514, %v513
      %560 = vst.msk [vmem:[#allocation2 + $0x160] sm:$0x3] %vm517, %v513
      %561 = vst.msk [vmem:[#allocation2 + $0x168] sm:$0xff] %vm514, %v513
      %562 = vst.msk [vmem:[#allocation2 + $0x170] sm:$0xff] %vm514, %v513
      %563 = vst.msk [vmem:[#allocation2 + $0x178] sm:$0x3] %vm517, %v513
      %564 = vst.msk [vmem:[#allocation2 + $0x180] sm:$0xff] %vm514, %v513
      %565 = vst.msk [vmem:[#allocation2 + $0x188] sm:$0xff] %vm514, %v513
      %566 = vst.msk [vmem:[#allocation2 + $0x190] sm:$0x3] %vm517, %v513
      %567 = vst.msk [vmem:[#allocation2 + $0x198] sm:$0xff] %vm514, %v513
      %568 = vst.msk [vmem:[#allocation2 + $0x1a0] sm:$0xff] %vm514, %v513
      %569 = vst.msk [vmem:[#allocation2 + $0x1a8] sm:$0x3] %vm517, %v513
      %s570 = scalar_lea.vmem [#allocation2], 24
      %571 = vst.msk [vmem:[%s570 + $0x1] sm:$0xff] %vm514, %v479
      %572 = vst.msk [vmem:[%s570 + $0x9] sm:$0xff] %vm514, %v480
      %573 = vst.msk [vmem:[%s570 + $0x19] sm:$0xff] %vm514, %v481
      %574 = vst.msk [vmem:[%s570 + $0x21] sm:$0xff] %vm514, %v482
      %575 = vst.msk [vmem:[%s570 + $0x31] sm:$0xff] %vm514, %v483
      %576 = vst.msk [vmem:[%s570 + $0x39] sm:$0xff] %vm514, %v484
      %577 = vst.msk [vmem:[%s570 + $0x49] sm:$0xff] %vm514, %v485
      %578 = vst.msk [vmem:[%s570 + $0x51] sm:$0xff] %vm514, %v486
      %579 = vst.msk [vmem:[%s570 + $0x61] sm:$0xff] %vm514, %v487
      %580 = vst.msk [vmem:[%s570 + $0x69] sm:$0xff] %vm514, %v488
      %581 = vst.msk [vmem:[%s570 + $0x79] sm:$0xff] %vm514, %v489
      %582 = vst.msk [vmem:[%s570 + $0x81] sm:$0xff] %vm514, %v490
      %583 = vst.msk [vmem:[%s570 + $0x91] sm:$0xff] %vm514, %v491
      %584 = vst.msk [vmem:[%s570 + $0x99] sm:$0xff] %vm514, %v492
      %585 = vst.msk [vmem:[%s570 + $0xa9] sm:$0xff] %vm514, %v493
      %586 = vst.msk [vmem:[%s570 + $0xb1] sm:$0xff] %vm514, %v494
      %587 = vst.msk [vmem:[%s570 + $0xc1] sm:$0xff] %vm514, %v495
      %588 = vst.msk [vmem:[%s570 + $0xc9] sm:$0xff] %vm514, %v496
      %589 = vst.msk [vmem:[%s570 + $0xd9] sm:$0xff] %vm514, %v497
      %590 = vst.msk [vmem:[%s570 + $0xe1] sm:$0xff] %vm514, %v498
      %591 = vst.msk [vmem:[%s570 + $0xf1] sm:$0xff] %vm514, %v499
      %592 = vst.msk [vmem:[%s570 + $0xf9] sm:$0xff] %vm514, %v500
      %593 = vst.msk [vmem:[%s570 + $0x109] sm:$0xff] %vm514, %v501
      %594 = vst.msk [vmem:[%s570 + $0x111] sm:$0xff] %vm514, %v502
      %595 = vst.msk [vmem:[%s570 + $0x121] sm:$0xff] %vm514, %v503
      %596 = vst.msk [vmem:[%s570 + $0x129] sm:$0xff] %vm514, %v504
      %597 = vst.msk [vmem:[%s570 + $0x139] sm:$0xff] %vm514, %v505
      %598 = vst.msk [vmem:[%s570 + $0x141] sm:$0xff] %vm514, %v506
      %599 = vst.msk [vmem:[%s570 + $0x151] sm:$0xff] %vm514, %v507
      %600 = vst.msk [vmem:[%s570 + $0x159] sm:$0xff] %vm514, %v508
      %601 = vst.msk [vmem:[%s570 + $0x169] sm:$0xff] %vm514, %v509
      %602 = vst.msk [vmem:[%s570 + $0x171] sm:$0xff] %vm514, %v510
      %v603 = vld [vmem:[%s2] sm:$0x7]
      %v604 = vld [vmem:[%s2 + $0x4] sm:$0x7]
      %v605 = vld [vmem:[%s2 + $0x8] sm:$0x7]
      %v606 = vld [vmem:[#allocation2] sm:$0xff]
      %v607 = vld [vmem:[#allocation2 + $0x8] sm:$0xff]
      %v608 = vld [vmem:[#allocation2 + $0x18] sm:$0xff]
      %v609 = vld [vmem:[#allocation2 + $0x20] sm:$0xff]
      %v610 = vld [vmem:[#allocation2 + $0x30] sm:$0xff]
      %v611 = vld [vmem:[#allocation2 + $0x38] sm:$0xff]
      %v612 = vld [vmem:[#allocation2 + $0x48] sm:$0xff]
      %v613 = vld [vmem:[#allocation2 + $0x50] sm:$0xff]
      %v614 = vld [vmem:[#allocation2 + $0x60] sm:$0xff]
      %v615 = vld [vmem:[#allocation2 + $0x68] sm:$0xff]
      %v616 = vld [vmem:[#allocation2 + $0x78] sm:$0xff]
      %v617 = vld [vmem:[#allocation2 + $0x80] sm:$0xff]
      %v618 = vld [vmem:[#allocation2 + $0x90] sm:$0xff]
      %v619 = vld [vmem:[#allocation2 + $0x98] sm:$0xff]
      %v620 = vld [vmem:[#allocation2 + $0xa8] sm:$0xff]
      %v621 = vld [vmem:[#allocation2 + $0xb0] sm:$0xff]
      %v622 = vld [vmem:[#allocation2 + $0xc0] sm:$0xff]
      %v623 = vld [vmem:[#allocation2 + $0xc8] sm:$0xff]
      %v624 = vld [vmem:[#allocation2 + $0xd8] sm:$0xff]
      %v625 = vld [vmem:[#allocation2 + $0xe0] sm:$0xff]
      %v626 = vld [vmem:[#allocation2 + $0xf0] sm:$0xff]
      %v627 = vld [vmem:[#allocation2 + $0xf8] sm:$0xff]
      %v628 = vld [vmem:[#allocation2 + $0x108] sm:$0xff]
      %v629 = vld [vmem:[#allocation2 + $0x110] sm:$0xff]
      %v630 = vld [vmem:[#allocation2 + $0x120] sm:$0xff]
      %v631 = vld [vmem:[#allocation2 + $0x128] sm:$0xff]
      %v632 = vld [vmem:[#allocation2 + $0x138] sm:$0xff]
      %v633 = vld [vmem:[#allocation2 + $0x140] sm:$0xff]
      %v634 = vld [vmem:[#allocation2 + $0x150] sm:$0xff]
      %v635 = vld [vmem:[#allocation2 + $0x158] sm:$0xff]
      %v636 = vld [vmem:[#allocation2 + $0x168] sm:$0xff]
      %v637 = vld [vmem:[#allocation2 + $0x170] sm:$0xff]
      %v638 = vperm.slane %v603, 0
      %v639 = vmul.f32 %v606, %v638
      %v640 = vmul.f32 %v607, %v638
      %v641 = vmul.f32 %v608, %v638
      %v642 = vmul.f32 %v609, %v638
      %v643 = vmul.f32 %v610, %v638
      %v644 = vmul.f32 %v611, %v638
      %v645 = vmul.f32 %v612, %v638
      %v646 = vmul.f32 %v613, %v638
      %v647 = vmul.f32 %v614, %v638
      %v648 = vmul.f32 %v615, %v638
      %v649 = vmul.f32 %v616, %v638
      %v650 = vmul.f32 %v617, %v638
      %v651 = vmul.f32 %v618, %v638
      %v652 = vmul.f32 %v619, %v638
      %v653 = vmul.f32 %v620, %v638
      %v654 = vmul.f32 %v621, %v638
      %v655 = vmul.f32 %v622, %v638
      %v656 = vmul.f32 %v623, %v638
      %v657 = vmul.f32 %v624, %v638
      %v658 = vmul.f32 %v625, %v638
      %v659 = vmul.f32 %v626, %v638
      %v660 = vmul.f32 %v627, %v638
      %v661 = vmul.f32 %v628, %v638
      %v662 = vmul.f32 %v629, %v638
      %v663 = vmul.f32 %v630, %v638
      %v664 = vmul.f32 %v631, %v638
      %v665 = vmul.f32 %v632, %v638
      %v666 = vmul.f32 %v633, %v638
      %v667 = vmul.f32 %v634, %v638
      %v668 = vmul.f32 %v635, %v638
      %v669 = vmul.f32 %v636, %v638
      %v670 = vmul.f32 %v637, %v638
      %v671 = vadd.f32 %v639, 0.0
      %v672 = vadd.f32 %v640, 0.0
      %v673 = vadd.f32 %v641, 0.0
      %v674 = vadd.f32 %v642, 0.0
      %v675 = vadd.f32 %v643, 0.0
      %v676 = vadd.f32 %v644, 0.0
      %v677 = vadd.f32 %v645, 0.0
      %v678 = vadd.f32 %v646, 0.0
      %v679 = vadd.f32 %v647, 0.0
      %v680 = vadd.f32 %v648, 0.0
      %v681 = vadd.f32 %v649, 0.0
      %v682 = vadd.f32 %v650, 0.0
      %v683 = vadd.f32 %v651, 0.0
      %v684 = vadd.f32 %v652, 0.0
      %v685 = vadd.f32 %v653, 0.0
      %v686 = vadd.f32 %v654, 0.0
      %v687 = vadd.f32 %v655, 0.0
      %v688 = vadd.f32 %v656, 0.0
      %v689 = vadd.f32 %v657, 0.0
      %v690 = vadd.f32 %v658, 0.0
      %v691 = vadd.f32 %v659, 0.0
      %v692 = vadd.f32 %v660, 0.0
      %v693 = vadd.f32 %v661, 0.0
      %v694 = vadd.f32 %v662, 0.0
      %v695 = vadd.f32 %v663, 0.0
      %v696 = vadd.f32 %v664, 0.0
      %v697 = vadd.f32 %v665, 0.0
      %v698 = vadd.f32 %v666, 0.0
      %v699 = vadd.f32 %v667, 0.0
      %v700 = vadd.f32 %v668, 0.0
      %v701 = vadd.f32 %v669, 0.0
      %v702 = vadd.f32 %v670, 0.0
      %v703 = vld [vmem:[#allocation2 + $0x1] sm:$0xff]
      %v704 = vld [vmem:[#allocation2 + $0x9] sm:$0xff]
      %v705 = vld [vmem:[#allocation2 + $0x19] sm:$0xff]
      %v706 = vld [vmem:[#allocation2 + $0x21] sm:$0xff]
      %v707 = vld [vmem:[#allocation2 + $0x31] sm:$0xff]
      %v708 = vld [vmem:[#allocation2 + $0x39] sm:$0xff]
      %v709 = vld [vmem:[#allocation2 + $0x49] sm:$0xff]
      %v710 = vld [vmem:[#allocation2 + $0x51] sm:$0xff]
      %v711 = vld [vmem:[#allocation2 + $0x61] sm:$0xff]
      %v712 = vld [vmem:[#allocation2 + $0x69] sm:$0xff]
      %v713 = vld [vmem:[#allocation2 + $0x79] sm:$0xff]
      %v714 = vld [vmem:[#allocation2 + $0x81] sm:$0xff]
      %v715 = vld [vmem:[#allocation2 + $0x91] sm:$0xff]
      %v716 = vld [vmem:[#allocation2 + $0x99] sm:$0xff]
      %v717 = vld [vmem:[#allocation2 + $0xa9] sm:$0xff]
      %v718 = vld [vmem:[#allocation2 + $0xb1] sm:$0xff]
      %v719 = vld [vmem:[#allocation2 + $0xc1] sm:$0xff]
      %v720 = vld [vmem:[#allocation2 + $0xc9] sm:$0xff]
      %v721 = vld [vmem:[#allocation2 + $0xd9] sm:$0xff]
      %v722 = vld [vmem:[#allocation2 + $0xe1] sm:$0xff]
      %v723 = vld [vmem:[#allocation2 + $0xf1] sm:$0xff]
      %v724 = vld [vmem:[#allocation2 + $0xf9] sm:$0xff]
      %v725 = vld [vmem:[#allocation2 + $0x109] sm:$0xff]
      %v726 = vld [vmem:[#allocation2 + $0x111] sm:$0xff]
      %v727 = vld [vmem:[#allocation2 + $0x121] sm:$0xff]
      %v728 = vld [vmem:[#allocation2 + $0x129] sm:$0xff]
      %v729 = vld [vmem:[#allocation2 + $0x139] sm:$0xff]
      %v730 = vld [vmem:[#allocation2 + $0x141] sm:$0xff]
      %v731 = vld [vmem:[#allocation2 + $0x151] sm:$0xff]
      %v732 = vld [vmem:[#allocation2 + $0x159] sm:$0xff]
      %v733 = vld [vmem:[#allocation2 + $0x169] sm:$0xff]
      %v734 = vld [vmem:[#allocation2 + $0x171] sm:$0xff]
      %v735 = vperm.slane %v603, 1
      %v736 = vmul.f32 %v703, %v735
      %v737 = vmul.f32 %v704, %v735
      %v738 = vmul.f32 %v705, %v735
      %v739 = vmul.f32 %v706, %v735
      %v740 = vmul.f32 %v707, %v735
      %v741 = vmul.f32 %v708, %v735
      %v742 = vmul.f32 %v709, %v735
      %v743 = vmul.f32 %v710, %v735
      %v744 = vmul.f32 %v711, %v735
      %v745 = vmul.f32 %v712, %v735
      %v746 = vmul.f32 %v713, %v735
      %v747 = vmul.f32 %v714, %v735
      %v748 = vmul.f32 %v715, %v735
      %v749 = vmul.f32 %v716, %v735
      %v750 = vmul.f32 %v717, %v735
      %v751 = vmul.f32 %v718, %v735
      %v752 = vmul.f32 %v719, %v735
      %v753 = vmul.f32 %v720, %v735
      %v754 = vmul.f32 %v721, %v735
      %v755 = vmul.f32 %v722, %v735
      %v756 = vmul.f32 %v723, %v735
      %v757 = vmul.f32 %v724, %v735
      %v758 = vmul.f32 %v725, %v735
      %v759 = vmul.f32 %v726, %v735
      %v760 = vmul.f32 %v727, %v735
      %v761 = vmul.f32 %v728, %v735
      %v762 = vmul.f32 %v729, %v735
      %v763 = vmul.f32 %v730, %v735
      %v764 = vmul.f32 %v731, %v735
      %v765 = vmul.f32 %v732, %v735
      %v766 = vmul.f32 %v733, %v735
      %v767 = vmul.f32 %v734, %v735
      %v768 = vadd.f32 %v671, %v736
      %v769 = vadd.f32 %v672, %v737
      %v770 = vadd.f32 %v673, %v738
      %v771 = vadd.f32 %v674, %v739
      %v772 = vadd.f32 %v675, %v740
      %v773 = vadd.f32 %v676, %v741
      %v774 = vadd.f32 %v677, %v742
      %v775 = vadd.f32 %v678, %v743
      %v776 = vadd.f32 %v679, %v744
      %v777 = vadd.f32 %v680, %v745
      %v778 = vadd.f32 %v681, %v746
      %v779 = vadd.f32 %v682, %v747
      %v780 = vadd.f32 %v683, %v748
      %v781 = vadd.f32 %v684, %v749
      %v782 = vadd.f32 %v685, %v750
      %v783 = vadd.f32 %v686, %v751
      %v784 = vadd.f32 %v687, %v752
      %v785 = vadd.f32 %v688, %v753
      %v786 = vadd.f32 %v689, %v754
      %v787 = vadd.f32 %v690, %v755
      %v788 = vadd.f32 %v691, %v756
      %v789 = vadd.f32 %v692, %v757
      %v790 = vadd.f32 %v693, %v758
      %v791 = vadd.f32 %v694, %v759
      %v792 = vadd.f32 %v695, %v760
      %v793 = vadd.f32 %v696, %v761
      %v794 = vadd.f32 %v697, %v762
      %v795 = vadd.f32 %v698, %v763
      %v796 = vadd.f32 %v699, %v764
      %v797 = vadd.f32 %v700, %v765
      %v798 = vadd.f32 %v701, %v766
      %v799 = vadd.f32 %v702, %v767
      %v800 = vld [vmem:[#allocation2 + $0x2] sm:$0xff]
      %v801 = vld [vmem:[#allocation2 + $0xa] sm:$0xff]
      %v802 = vld [vmem:[#allocation2 + $0x1a] sm:$0xff]
      %v803 = vld [vmem:[#allocation2 + $0x22] sm:$0xff]
      %v804 = vld [vmem:[#allocation2 + $0x32] sm:$0xff]
      %v805 = vld [vmem:[#allocation2 + $0x3a] sm:$0xff]
      %v806 = vld [vmem:[#allocation2 + $0x4a] sm:$0xff]
      %v807 = vld [vmem:[#allocation2 + $0x52] sm:$0xff]
      %v808 = vld [vmem:[#allocation2 + $0x62] sm:$0xff]
      %v809 = vld [vmem:[#allocation2 + $0x6a] sm:$0xff]
      %v810 = vld [vmem:[#allocation2 + $0x7a] sm:$0xff]
      %v811 = vld [vmem:[#allocation2 + $0x82] sm:$0xff]
      %v812 = vld [vmem:[#allocation2 + $0x92] sm:$0xff]
      %v813 = vld [vmem:[#allocation2 + $0x9a] sm:$0xff]
      %v814 = vld [vmem:[#allocation2 + $0xaa] sm:$0xff]
      %v815 = vld [vmem:[#allocation2 + $0xb2] sm:$0xff]
      %v816 = vld [vmem:[#allocation2 + $0xc2] sm:$0xff]
      %v817 = vld [vmem:[#allocation2 + $0xca] sm:$0xff]
      %v818 = vld [vmem:[#allocation2 + $0xda] sm:$0xff]
      %v819 = vld [vmem:[#allocation2 + $0xe2] sm:$0xff]
      %v820 = vld [vmem:[#allocation2 + $0xf2] sm:$0xff]
      %v821 = vld [vmem:[#allocation2 + $0xfa] sm:$0xff]
      %v822 = vld [vmem:[#allocation2 + $0x10a] sm:$0xff]
      %v823 = vld [vmem:[#allocation2 + $0x112] sm:$0xff]
      %v824 = vld [vmem:[#allocation2 + $0x122] sm:$0xff]
      %v825 = vld [vmem:[#allocation2 + $0x12a] sm:$0xff]
      %v826 = vld [vmem:[#allocation2 + $0x13a] sm:$0xff]
      %v827 = vld [vmem:[#allocation2 + $0x142] sm:$0xff]
      %v828 = vld [vmem:[#allocation2 + $0x152] sm:$0xff]
      %v829 = vld [vmem:[#allocation2 + $0x15a] sm:$0xff]
      %v830 = vld [vmem:[#allocation2 + $0x16a] sm:$0xff]
      %v831 = vld [vmem:[#allocation2 + $0x172] sm:$0xff]
      %v832 = vperm.slane %v603, 2
      %v833 = vmul.f32 %v800, %v832
      %v834 = vmul.f32 %v801, %v832
      %v835 = vmul.f32 %v802, %v832
      %v836 = vmul.f32 %v803, %v832
      %v837 = vmul.f32 %v804, %v832
      %v838 = vmul.f32 %v805, %v832
      %v839 = vmul.f32 %v806, %v832
      %v840 = vmul.f32 %v807, %v832
      %v841 = vmul.f32 %v808, %v832
      %v842 = vmul.f32 %v809, %v832
      %v843 = vmul.f32 %v810, %v832
      %v844 = vmul.f32 %v811, %v832
      %v845 = vmul.f32 %v812, %v832
      %v846 = vmul.f32 %v813, %v832
      %v847 = vmul.f32 %v814, %v832
      %v848 = vmul.f32 %v815, %v832
      %v849 = vmul.f32 %v816, %v832
      %v850 = vmul.f32 %v817, %v832
      %v851 = vmul.f32 %v818, %v832
      %v852 = vmul.f32 %v819, %v832
      %v853 = vmul.f32 %v820, %v832
      %v854 = vmul.f32 %v821, %v832
      %v855 = vmul.f32 %v822, %v832
      %v856 = vmul.f32 %v823, %v832
      %v857 = vmul.f32 %v824, %v832
      %v858 = vmul.f32 %v825, %v832
      %v859 = vmul.f32 %v826, %v832
      %v860 = vmul.f32 %v827, %v832
      %v861 = vmul.f32 %v828, %v832
      %v862 = vmul.f32 %v829, %v832
      %v863 = vmul.f32 %v830, %v832
      %v864 = vmul.f32 %v831, %v832
      %v865 = vadd.f32 %v768, %v833
      %v866 = vadd.f32 %v769, %v834
      %v867 = vadd.f32 %v770, %v835
      %v868 = vadd.f32 %v771, %v836
      %v869 = vadd.f32 %v772, %v837
      %v870 = vadd.f32 %v773, %v838
      %v871 = vadd.f32 %v774, %v839
      %v872 = vadd.f32 %v775, %v840
      %v873 = vadd.f32 %v776, %v841
      %v874 = vadd.f32 %v777, %v842
      %v875 = vadd.f32 %v778, %v843
      %v876 = vadd.f32 %v779, %v844
      %v877 = vadd.f32 %v780, %v845
      %v878 = vadd.f32 %v781, %v846
      %v879 = vadd.f32 %v782, %v847
      %v880 = vadd.f32 %v783, %v848
      %v881 = vadd.f32 %v784, %v849
      %v882 = vadd.f32 %v785, %v850
      %v883 = vadd.f32 %v786, %v851
      %v884 = vadd.f32 %v787, %v852
      %v885 = vadd.f32 %v788, %v853
      %v886 = vadd.f32 %v789, %v854
      %v887 = vadd.f32 %v790, %v855
      %v888 = vadd.f32 %v791, %v856
      %v889 = vadd.f32 %v792, %v857
      %v890 = vadd.f32 %v793, %v858
      %v891 = vadd.f32 %v794, %v859
      %v892 = vadd.f32 %v795, %v860
      %v893 = vadd.f32 %v796, %v861
      %v894 = vadd.f32 %v797, %v862
      %v895 = vadd.f32 %v798, %v863
      %v896 = vadd.f32 %v799, %v864
      %v897 = vld [vmem:[%s570] sm:$0xff]
      %v898 = vld [vmem:[%s570 + $0x8] sm:$0xff]
      %v899 = vld [vmem:[%s570 + $0x18] sm:$0xff]
      %v900 = vld [vmem:[%s570 + $0x20] sm:$0xff]
      %v901 = vld [vmem:[%s570 + $0x30] sm:$0xff]
      %v902 = vld [vmem:[%s570 + $0x38] sm:$0xff]
      %v903 = vld [vmem:[%s570 + $0x48] sm:$0xff]
      %v904 = vld [vmem:[%s570 + $0x50] sm:$0xff]
      %v905 = vld [vmem:[%s570 + $0x60] sm:$0xff]
      %v906 = vld [vmem:[%s570 + $0x68] sm:$0xff]
      %v907 = vld [vmem:[%s570 + $0x78] sm:$0xff]
      %v908 = vld [vmem:[%s570 + $0x80] sm:$0xff]
      %v909 = vld [vmem:[%s570 + $0x90] sm:$0xff]
      %v910 = vld [vmem:[%s570 + $0x98] sm:$0xff]
      %v911 = vld [vmem:[%s570 + $0xa8] sm:$0xff]
      %v912 = vld [vmem:[%s570 + $0xb0] sm:$0xff]
      %v913 = vld [vmem:[%s570 + $0xc0] sm:$0xff]
      %v914 = vld [vmem:[%s570 + $0xc8] sm:$0xff]
      %v915 = vld [vmem:[%s570 + $0xd8] sm:$0xff]
      %v916 = vld [vmem:[%s570 + $0xe0] sm:$0xff]
      %v917 = vld [vmem:[%s570 + $0xf0] sm:$0xff]
      %v918 = vld [vmem:[%s570 + $0xf8] sm:$0xff]
      %v919 = vld [vmem:[%s570 + $0x108] sm:$0xff]
      %v920 = vld [vmem:[%s570 + $0x110] sm:$0xff]
      %v921 = vld [vmem:[%s570 + $0x120] sm:$0xff]
      %v922 = vld [vmem:[%s570 + $0x128] sm:$0xff]
      %v923 = vld [vmem:[%s570 + $0x138] sm:$0xff]
      %v924 = vld [vmem:[%s570 + $0x140] sm:$0xff]
      %v925 = vld [vmem:[%s570 + $0x150] sm:$0xff]
      %v926 = vld [vmem:[%s570 + $0x158] sm:$0xff]
      %v927 = vld [vmem:[%s570 + $0x168] sm:$0xff]
      %v928 = vld [vmem:[%s570 + $0x170] sm:$0xff]
      %v929 = vperm.slane %v604, 0
      %v930 = vmul.f32 %v897, %v929
      %v931 = vmul.f32 %v898, %v929
      %v932 = vmul.f32 %v899, %v929
      %v933 = vmul.f32 %v900, %v929
      %v934 = vmul.f32 %v901, %v929
      %v935 = vmul.f32 %v902, %v929
      %v936 = vmul.f32 %v903, %v929
      %v937 = vmul.f32 %v904, %v929
      %v938 = vmul.f32 %v905, %v929
      %v939 = vmul.f32 %v906, %v929
      %v940 = vmul.f32 %v907, %v929
      %v941 = vmul.f32 %v908, %v929
      %v942 = vmul.f32 %v909, %v929
      %v943 = vmul.f32 %v910, %v929
      %v944 = vmul.f32 %v911, %v929
      %v945 = vmul.f32 %v912, %v929
      %v946 = vmul.f32 %v913, %v929
      %v947 = vmul.f32 %v914, %v929
      %v948 = vmul.f32 %v915, %v929
      %v949 = vmul.f32 %v916, %v929
      %v950 = vmul.f32 %v917, %v929
      %v951 = vmul.f32 %v918, %v929
      %v952 = vmul.f32 %v919, %v929
      %v953 = vmul.f32 %v920, %v929
      %v954 = vmul.f32 %v921, %v929
      %v955 = vmul.f32 %v922, %v929
      %v956 = vmul.f32 %v923, %v929
      %v957 = vmul.f32 %v924, %v929
      %v958 = vmul.f32 %v925, %v929
      %v959 = vmul.f32 %v926, %v929
      %v960 = vmul.f32 %v927, %v929
      %v961 = vmul.f32 %v928, %v929
      %v962 = vadd.f32 %v865, %v930
      %v963 = vadd.f32 %v866, %v931
      %v964 = vadd.f32 %v867, %v932
      %v965 = vadd.f32 %v868, %v933
      %v966 = vadd.f32 %v869, %v934
      %v967 = vadd.f32 %v870, %v935
      %v968 = vadd.f32 %v871, %v936
      %v969 = vadd.f32 %v872, %v937
      %v970 = vadd.f32 %v873, %v938
      %v971 = vadd.f32 %v874, %v939
      %v972 = vadd.f32 %v875, %v940
      %v973 = vadd.f32 %v876, %v941
      %v974 = vadd.f32 %v877, %v942
      %v975 = vadd.f32 %v878, %v943
      %v976 = vadd.f32 %v879, %v944
      %v977 = vadd.f32 %v880, %v945
      %v978 = vadd.f32 %v881, %v946
      %v979 = vadd.f32 %v882, %v947
      %v980 = vadd.f32 %v883, %v948
      %v981 = vadd.f32 %v884, %v949
      %v982 = vadd.f32 %v885, %v950
      %v983 = vadd.f32 %v886, %v951
      %v984 = vadd.f32 %v887, %v952
      %v985 = vadd.f32 %v888, %v953
      %v986 = vadd.f32 %v889, %v954
      %v987 = vadd.f32 %v890, %v955
      %v988 = vadd.f32 %v891, %v956
      %v989 = vadd.f32 %v892, %v957
      %v990 = vadd.f32 %v893, %v958
      %v991 = vadd.f32 %v894, %v959
      %v992 = vadd.f32 %v895, %v960
      %v993 = vadd.f32 %v896, %v961
      %v994 = vld [vmem:[%s570 + $0x1] sm:$0xff]
      %v995 = vld [vmem:[%s570 + $0x9] sm:$0xff]
      %v996 = vld [vmem:[%s570 + $0x19] sm:$0xff]
      %v997 = vld [vmem:[%s570 + $0x21] sm:$0xff]
      %v998 = vld [vmem:[%s570 + $0x31] sm:$0xff]
      %v999 = vld [vmem:[%s570 + $0x39] sm:$0xff]
      %v1000 = vld [vmem:[%s570 + $0x49] sm:$0xff]
      %v1001 = vld [vmem:[%s570 + $0x51] sm:$0xff]
      %v1002 = vld [vmem:[%s570 + $0x61] sm:$0xff]
      %v1003 = vld [vmem:[%s570 + $0x69] sm:$0xff]
      %v1004 = vld [vmem:[%s570 + $0x79] sm:$0xff]
      %v1005 = vld [vmem:[%s570 + $0x81] sm:$0xff]
      %v1006 = vld [vmem:[%s570 + $0x91] sm:$0xff]
      %v1007 = vld [vmem:[%s570 + $0x99] sm:$0xff]
      %v1008 = vld [vmem:[%s570 + $0xa9] sm:$0xff]
      %v1009 = vld [vmem:[%s570 + $0xb1] sm:$0xff]
      %v1010 = vld [vmem:[%s570 + $0xc1] sm:$0xff]
      %v1011 = vld [vmem:[%s570 + $0xc9] sm:$0xff]
      %v1012 = vld [vmem:[%s570 + $0xd9] sm:$0xff]
      %v1013 = vld [vmem:[%s570 + $0xe1] sm:$0xff]
      %v1014 = vld [vmem:[%s570 + $0xf1] sm:$0xff]
      %v1015 = vld [vmem:[%s570 + $0xf9] sm:$0xff]
      %v1016 = vld [vmem:[%s570 + $0x109] sm:$0xff]
      %v1017 = vld [vmem:[%s570 + $0x111] sm:$0xff]
      %v1018 = vld [vmem:[%s570 + $0x121] sm:$0xff]
      %v1019 = vld [vmem:[%s570 + $0x129] sm:$0xff]
      %v1020 = vld [vmem:[%s570 + $0x139] sm:$0xff]
      %v1021 = vld [vmem:[%s570 + $0x141] sm:$0xff]
      %v1022 = vld [vmem:[%s570 + $0x151] sm:$0xff]
      %v1023 = vld [vmem:[%s570 + $0x159] sm:$0xff]
      %v1024 = vld [vmem:[%s570 + $0x169] sm:$0xff]
      %v1025 = vld [vmem:[%s570 + $0x171] sm:$0xff]
      %v1026 = vperm.slane %v604, 1
      %v1027 = vmul.f32 %v994, %v1026
      %v1028 = vmul.f32 %v995, %v1026
      %v1029 = vmul.f32 %v996, %v1026
      %v1030 = vmul.f32 %v997, %v1026
      %v1031 = vmul.f32 %v998, %v1026
      %v1032 = vmul.f32 %v999, %v1026
      %v1033 = vmul.f32 %v1000, %v1026
      %v1034 = vmul.f32 %v1001, %v1026
      %v1035 = vmul.f32 %v1002, %v1026
      %v1036 = vmul.f32 %v1003, %v1026
      %v1037 = vmul.f32 %v1004, %v1026
      %v1038 = vmul.f32 %v1005, %v1026
      %v1039 = vmul.f32 %v1006, %v1026
      %v1040 = vmul.f32 %v1007, %v1026
      %v1041 = vmul.f32 %v1008, %v1026
      %v1042 = vmul.f32 %v1009, %v1026
      %v1043 = vmul.f32 %v1010, %v1026
      %v1044 = vmul.f32 %v1011, %v1026
      %v1045 = vmul.f32 %v1012, %v1026
      %v1046 = vmul.f32 %v1013, %v1026
      %v1047 = vmul.f32 %v1014, %v1026
      %v1048 = vmul.f32 %v1015, %v1026
      %v1049 = vmul.f32 %v1016, %v1026
      %v1050 = vmul.f32 %v1017, %v1026
      %v1051 = vmul.f32 %v1018, %v1026
      %v1052 = vmul.f32 %v1019, %v1026
      %v1053 = vmul.f32 %v1020, %v1026
      %v1054 = vmul.f32 %v1021, %v1026
      %v1055 = vmul.f32 %v1022, %v1026
      %v1056 = vmul.f32 %v1023, %v1026
      %v1057 = vmul.f32 %v1024, %v1026
      %v1058 = vmul.f32 %v1025, %v1026
      %v1059 = vadd.f32 %v962, %v1027
      %v1060 = vadd.f32 %v963, %v1028
      %v1061 = vadd.f32 %v964, %v1029
      %v1062 = vadd.f32 %v965, %v1030
      %v1063 = vadd.f32 %v966, %v1031
      %v1064 = vadd.f32 %v967, %v1032
      %v1065 = vadd.f32 %v968, %v1033
      %v1066 = vadd.f32 %v969, %v1034
      %v1067 = vadd.f32 %v970, %v1035
      %v1068 = vadd.f32 %v971, %v1036
      %v1069 = vadd.f32 %v972, %v1037
      %v1070 = vadd.f32 %v973, %v1038
      %v1071 = vadd.f32 %v974, %v1039
      %v1072 = vadd.f32 %v975, %v1040
      %v1073 = vadd.f32 %v976, %v1041
      %v1074 = vadd.f32 %v977, %v1042
      %v1075 = vadd.f32 %v978, %v1043
      %v1076 = vadd.f32 %v979, %v1044
      %v1077 = vadd.f32 %v980, %v1045
      %v1078 = vadd.f32 %v981, %v1046
      %v1079 = vadd.f32 %v982, %v1047
      %v1080 = vadd.f32 %v983, %v1048
      %v1081 = vadd.f32 %v984, %v1049
      %v1082 = vadd.f32 %v985, %v1050
      %v1083 = vadd.f32 %v986, %v1051
      %v1084 = vadd.f32 %v987, %v1052
      %v1085 = vadd.f32 %v988, %v1053
      %v1086 = vadd.f32 %v989, %v1054
      %v1087 = vadd.f32 %v990, %v1055
      %v1088 = vadd.f32 %v991, %v1056
      %v1089 = vadd.f32 %v992, %v1057
      %v1090 = vadd.f32 %v993, %v1058
      %v1091 = vld [vmem:[%s570 + $0x2] sm:$0xff]
      %v1092 = vld [vmem:[%s570 + $0xa] sm:$0xff]
      %v1093 = vld [vmem:[%s570 + $0x1a] sm:$0xff]
      %v1094 = vld [vmem:[%s570 + $0x22] sm:$0xff]
      %v1095 = vld [vmem:[%s570 + $0x32] sm:$0xff]
      %v1096 = vld [vmem:[%s570 + $0x3a] sm:$0xff]
      %v1097 = vld [vmem:[%s570 + $0x4a] sm:$0xff]
      %v1098 = vld [vmem:[%s570 + $0x52] sm:$0xff]
      %v1099 = vld [vmem:[%s570 + $0x62] sm:$0xff]
      %v1100 = vld [vmem:[%s570 + $0x6a] sm:$0xff]
      %v1101 = vld [vmem:[%s570 + $0x7a] sm:$0xff]
      %v1102 = vld [vmem:[%s570 + $0x82] sm:$0xff]
      %v1103 = vld [vmem:[%s570 + $0x92] sm:$0xff]
      %v1104 = vld [vmem:[%s570 + $0x9a] sm:$0xff]
      %v1105 = vld [vmem:[%s570 + $0xaa] sm:$0xff]
      %v1106 = vld [vmem:[%s570 + $0xb2] sm:$0xff]
      %v1107 = vld [vmem:[%s570 + $0xc2] sm:$0xff]
      %v1108 = vld [vmem:[%s570 + $0xca] sm:$0xff]
      %v1109 = vld [vmem:[%s570 + $0xda] sm:$0xff]
      %v1110 = vld [vmem:[%s570 + $0xe2] sm:$0xff]
      %v1111 = vld [vmem:[%s570 + $0xf2] sm:$0xff]
      %v1112 = vld [vmem:[%s570 + $0xfa] sm:$0xff]
      %v1113 = vld [vmem:[%s570 + $0x10a] sm:$0xff]
      %v1114 = vld [vmem:[%s570 + $0x112] sm:$0xff]
      %v1115 = vld [vmem:[%s570 + $0x122] sm:$0xff]
      %v1116 = vld [vmem:[%s570 + $0x12a] sm:$0xff]
      %v1117 = vld [vmem:[%s570 + $0x13a] sm:$0xff]
      %v1118 = vld [vmem:[%s570 + $0x142] sm:$0xff]
      %v1119 = vld [vmem:[%s570 + $0x152] sm:$0xff]
      %v1120 = vld [vmem:[%s570 + $0x15a] sm:$0xff]
      %v1121 = vld [vmem:[%s570 + $0x16a] sm:$0xff]
      %v1122 = vld [vmem:[%s570 + $0x172] sm:$0xff]
      %v1123 = vperm.slane %v604, 2
      %v1124 = vmul.f32 %v1091, %v1123
      %v1125 = vmul.f32 %v1092, %v1123
      %v1126 = vmul.f32 %v1093, %v1123
      %v1127 = vmul.f32 %v1094, %v1123
      %v1128 = vmul.f32 %v1095, %v1123
      %v1129 = vmul.f32 %v1096, %v1123
      %v1130 = vmul.f32 %v1097, %v1123
      %v1131 = vmul.f32 %v1098, %v1123
      %v1132 = vmul.f32 %v1099, %v1123
      %v1133 = vmul.f32 %v1100, %v1123
      %v1134 = vmul.f32 %v1101, %v1123
      %v1135 = vmul.f32 %v1102, %v1123
      %v1136 = vmul.f32 %v1103, %v1123
      %v1137 = vmul.f32 %v1104, %v1123
      %v1138 = vmul.f32 %v1105, %v1123
      %v1139 = vmul.f32 %v1106, %v1123
      %v1140 = vmul.f32 %v1107, %v1123
      %v1141 = vmul.f32 %v1108, %v1123
      %v1142 = vmul.f32 %v1109, %v1123
      %v1143 = vmul.f32 %v1110, %v1123
      %v1144 = vmul.f32 %v1111, %v1123
      %v1145 = vmul.f32 %v1112, %v1123
      %v1146 = vmul.f32 %v1113, %v1123
      %v1147 = vmul.f32 %v1114, %v1123
      %v1148 = vmul.f32 %v1115, %v1123
      %v1149 = vmul.f32 %v1116, %v1123
      %v1150 = vmul.f32 %v1117, %v1123
      %v1151 = vmul.f32 %v1118, %v1123
      %v1152 = vmul.f32 %v1119, %v1123
      %v1153 = vmul.f32 %v1120, %v1123
      %v1154 = vmul.f32 %v1121, %v1123
      %v1155 = vmul.f32 %v1122, %v1123
      %v1156 = vadd.f32 %v1059, %v1124
      %v1157 = vadd.f32 %v1060, %v1125
      %v1158 = vadd.f32 %v1061, %v1126
      %v1159 = vadd.f32 %v1062, %v1127
      %v1160 = vadd.f32 %v1063, %v1128
      %v1161 = vadd.f32 %v1064, %v1129
      %v1162 = vadd.f32 %v1065, %v1130
      %v1163 = vadd.f32 %v1066, %v1131
      %v1164 = vadd.f32 %v1067, %v1132
      %v1165 = vadd.f32 %v1068, %v1133
      %v1166 = vadd.f32 %v1069, %v1134
      %v1167 = vadd.f32 %v1070, %v1135
      %v1168 = vadd.f32 %v1071, %v1136
      %v1169 = vadd.f32 %v1072, %v1137
      %v1170 = vadd.f32 %v1073, %v1138
      %v1171 = vadd.f32 %v1074, %v1139
      %v1172 = vadd.f32 %v1075, %v1140
      %v1173 = vadd.f32 %v1076, %v1141
      %v1174 = vadd.f32 %v1077, %v1142
      %v1175 = vadd.f32 %v1078, %v1143
      %v1176 = vadd.f32 %v1079, %v1144
      %v1177 = vadd.f32 %v1080, %v1145
      %v1178 = vadd.f32 %v1081, %v1146
      %v1179 = vadd.f32 %v1082, %v1147
      %v1180 = vadd.f32 %v1083, %v1148
      %v1181 = vadd.f32 %v1084, %v1149
      %v1182 = vadd.f32 %v1085, %v1150
      %v1183 = vadd.f32 %v1086, %v1151
      %v1184 = vadd.f32 %v1087, %v1152
      %v1185 = vadd.f32 %v1088, %v1153
      %v1186 = vadd.f32 %v1089, %v1154
      %v1187 = vadd.f32 %v1090, %v1155
      %s1188 = scalar_lea.vmem [#allocation2], 48
      %v1189 = vld [vmem:[%s1188] sm:$0xff]
      %v1190 = vld [vmem:[%s1188 + $0x8] sm:$0xff]
      %v1191 = vld [vmem:[%s1188 + $0x18] sm:$0xff]
      %v1192 = vld [vmem:[%s1188 + $0x20] sm:$0xff]
      %v1193 = vld [vmem:[%s1188 + $0x30] sm:$0xff]
      %v1194 = vld [vmem:[%s1188 + $0x38] sm:$0xff]
      %v1195 = vld [vmem:[%s1188 + $0x48] sm:$0xff]
      %v1196 = vld [vmem:[%s1188 + $0x50] sm:$0xff]
      %v1197 = vld [vmem:[%s1188 + $0x60] sm:$0xff]
      %v1198 = vld [vmem:[%s1188 + $0x68] sm:$0xff]
      %v1199 = vld [vmem:[%s1188 + $0x78] sm:$0xff]
      %v1200 = vld [vmem:[%s1188 + $0x80] sm:$0xff]
      %v1201 = vld [vmem:[%s1188 + $0x90] sm:$0xff]
      %v1202 = vld [vmem:[%s1188 + $0x98] sm:$0xff]
      %v1203 = vld [vmem:[%s1188 + $0xa8] sm:$0xff]
      %v1204 = vld [vmem:[%s1188 + $0xb0] sm:$0xff]
      %v1205 = vld [vmem:[%s1188 + $0xc0] sm:$0xff]
      %v1206 = vld [vmem:[%s1188 + $0xc8] sm:$0xff]
      %v1207 = vld [vmem:[%s1188 + $0xd8] sm:$0xff]
      %v1208 = vld [vmem:[%s1188 + $0xe0] sm:$0xff]
      %v1209 = vld [vmem:[%s1188 + $0xf0] sm:$0xff]
      %v1210 = vld [vmem:[%s1188 + $0xf8] sm:$0xff]
      %v1211 = vld [vmem:[%s1188 + $0x108] sm:$0xff]
      %v1212 = vld [vmem:[%s1188 + $0x110] sm:$0xff]
      %v1213 = vld [vmem:[%s1188 + $0x120] sm:$0xff]
      %v1214 = vld [vmem:[%s1188 + $0x128] sm:$0xff]
      %v1215 = vld [vmem:[%s1188 + $0x138] sm:$0xff]
      %v1216 = vld [vmem:[%s1188 + $0x140] sm:$0xff]
      %v1217 = vld [vmem:[%s1188 + $0x150] sm:$0xff]
      %v1218 = vld [vmem:[%s1188 + $0x158] sm:$0xff]
      %v1219 = vld [vmem:[%s1188 + $0x168] sm:$0xff]
      %v1220 = vld [vmem:[%s1188 + $0x170] sm:$0xff]
      %v1221 = vperm.slane %v605, 0
      %v1222 = vmul.f32 %v1189, %v1221
      %v1223 = vmul.f32 %v1190, %v1221
      %v1224 = vmul.f32 %v1191, %v1221
      %v1225 = vmul.f32 %v1192, %v1221
      %v1226 = vmul.f32 %v1193, %v1221
      %v1227 = vmul.f32 %v1194, %v1221
      %v1228 = vmul.f32 %v1195, %v1221
      %v1229 = vmul.f32 %v1196, %v1221
      %v1230 = vmul.f32 %v1197, %v1221
      %v1231 = vmul.f32 %v1198, %v1221
      %v1232 = vmul.f32 %v1199, %v1221
      %v1233 = vmul.f32 %v1200, %v1221
      %v1234 = vmul.f32 %v1201, %v1221
      %v1235 = vmul.f32 %v1202, %v1221
      %v1236 = vmul.f32 %v1203, %v1221
      %v1237 = vmul.f32 %v1204, %v1221
      %v1238 = vmul.f32 %v1205, %v1221
      %v1239 = vmul.f32 %v1206, %v1221
      %v1240 = vmul.f32 %v1207, %v1221
      %v1241 = vmul.f32 %v1208, %v1221
      %v1242 = vmul.f32 %v1209, %v1221
      %v1243 = vmul.f32 %v1210, %v1221
      %v1244 = vmul.f32 %v1211, %v1221
      %v1245 = vmul.f32 %v1212, %v1221
      %v1246 = vmul.f32 %v1213, %v1221
      %v1247 = vmul.f32 %v1214, %v1221
      %v1248 = vmul.f32 %v1215, %v1221
      %v1249 = vmul.f32 %v1216, %v1221
      %v1250 = vmul.f32 %v1217, %v1221
      %v1251 = vmul.f32 %v1218, %v1221
      %v1252 = vmul.f32 %v1219, %v1221
      %v1253 = vmul.f32 %v1220, %v1221
      %v1254 = vadd.f32 %v1156, %v1222
      %v1255 = vadd.f32 %v1157, %v1223
      %v1256 = vadd.f32 %v1158, %v1224
      %v1257 = vadd.f32 %v1159, %v1225
      %v1258 = vadd.f32 %v1160, %v1226
      %v1259 = vadd.f32 %v1161, %v1227
      %v1260 = vadd.f32 %v1162, %v1228
      %v1261 = vadd.f32 %v1163, %v1229
      %v1262 = vadd.f32 %v1164, %v1230
      %v1263 = vadd.f32 %v1165, %v1231
      %v1264 = vadd.f32 %v1166, %v1232
      %v1265 = vadd.f32 %v1167, %v1233
      %v1266 = vadd.f32 %v1168, %v1234
      %v1267 = vadd.f32 %v1169, %v1235
      %v1268 = vadd.f32 %v1170, %v1236
      %v1269 = vadd.f32 %v1171, %v1237
      %v1270 = vadd.f32 %v1172, %v1238
      %v1271 = vadd.f32 %v1173, %v1239
      %v1272 = vadd.f32 %v1174, %v1240
      %v1273 = vadd.f32 %v1175, %v1241
      %v1274 = vadd.f32 %v1176, %v1242
      %v1275 = vadd.f32 %v1177, %v1243
      %v1276 = vadd.f32 %v1178, %v1244
      %v1277 = vadd.f32 %v1179, %v1245
      %v1278 = vadd.f32 %v1180, %v1246
      %v1279 = vadd.f32 %v1181, %v1247
      %v1280 = vadd.f32 %v1182, %v1248
      %v1281 = vadd.f32 %v1183, %v1249
      %v1282 = vadd.f32 %v1184, %v1250
      %v1283 = vadd.f32 %v1185, %v1251
      %v1284 = vadd.f32 %v1186, %v1252
      %v1285 = vadd.f32 %v1187, %v1253
      %v1286 = vld [vmem:[%s1188 + $0x1] sm:$0xff]
      %v1287 = vld [vmem:[%s1188 + $0x9] sm:$0xff]
      %v1288 = vld [vmem:[%s1188 + $0x19] sm:$0xff]
      %v1289 = vld [vmem:[%s1188 + $0x21] sm:$0xff]
      %v1290 = vld [vmem:[%s1188 + $0x31] sm:$0xff]
      %v1291 = vld [vmem:[%s1188 + $0x39] sm:$0xff]
      %v1292 = vld [vmem:[%s1188 + $0x49] sm:$0xff]
      %v1293 = vld [vmem:[%s1188 + $0x51] sm:$0xff]
      %v1294 = vld [vmem:[%s1188 + $0x61] sm:$0xff]
      %v1295 = vld [vmem:[%s1188 + $0x69] sm:$0xff]
      %v1296 = vld [vmem:[%s1188 + $0x79] sm:$0xff]
      %v1297 = vld [vmem:[%s1188 + $0x81] sm:$0xff]
      %v1298 = vld [vmem:[%s1188 + $0x91] sm:$0xff]
      %v1299 = vld [vmem:[%s1188 + $0x99] sm:$0xff]
      %v1300 = vld [vmem:[%s1188 + $0xa9] sm:$0xff]
      %v1301 = vld [vmem:[%s1188 + $0xb1] sm:$0xff]
      %v1302 = vld [vmem:[%s1188 + $0xc1] sm:$0xff]
      %v1303 = vld [vmem:[%s1188 + $0xc9] sm:$0xff]
      %v1304 = vld [vmem:[%s1188 + $0xd9] sm:$0xff]
      %v1305 = vld [vmem:[%s1188 + $0xe1] sm:$0xff]
      %v1306 = vld [vmem:[%s1188 + $0xf1] sm:$0xff]
      %v1307 = vld [vmem:[%s1188 + $0xf9] sm:$0xff]
      %v1308 = vld [vmem:[%s1188 + $0x109] sm:$0xff]
      %v1309 = vld [vmem:[%s1188 + $0x111] sm:$0xff]
      %v1310 = vld [vmem:[%s1188 + $0x121] sm:$0xff]
      %v1311 = vld [vmem:[%s1188 + $0x129] sm:$0xff]
      %v1312 = vld [vmem:[%s1188 + $0x139] sm:$0xff]
      %v1313 = vld [vmem:[%s1188 + $0x141] sm:$0xff]
      %v1314 = vld [vmem:[%s1188 + $0x151] sm:$0xff]
      %v1315 = vld [vmem:[%s1188 + $0x159] sm:$0xff]
      %v1316 = vld [vmem:[%s1188 + $0x169] sm:$0xff]
      %v1317 = vld [vmem:[%s1188 + $0x171] sm:$0xff]
      %v1318 = vperm.slane %v605, 1
      %v1319 = vmul.f32 %v1286, %v1318
      %v1320 = vmul.f32 %v1287, %v1318
      %v1321 = vmul.f32 %v1288, %v1318
      %v1322 = vmul.f32 %v1289, %v1318
      %v1323 = vmul.f32 %v1290, %v1318
      %v1324 = vmul.f32 %v1291, %v1318
      %v1325 = vmul.f32 %v1292, %v1318
      %v1326 = vmul.f32 %v1293, %v1318
      %v1327 = vmul.f32 %v1294, %v1318
      %v1328 = vmul.f32 %v1295, %v1318
      %v1329 = vmul.f32 %v1296, %v1318
      %v1330 = vmul.f32 %v1297, %v1318
      %v1331 = vmul.f32 %v1298, %v1318
      %v1332 = vmul.f32 %v1299, %v1318
      %v1333 = vmul.f32 %v1300, %v1318
      %v1334 = vmul.f32 %v1301, %v1318
      %v1335 = vmul.f32 %v1302, %v1318
      %v1336 = vmul.f32 %v1303, %v1318
      %v1337 = vmul.f32 %v1304, %v1318
      %v1338 = vmul.f32 %v1305, %v1318
      %v1339 = vmul.f32 %v1306, %v1318
      %v1340 = vmul.f32 %v1307, %v1318
      %v1341 = vmul.f32 %v1308, %v1318
      %v1342 = vmul.f32 %v1309, %v1318
      %v1343 = vmul.f32 %v1310, %v1318
      %v1344 = vmul.f32 %v1311, %v1318
      %v1345 = vmul.f32 %v1312, %v1318
      %v1346 = vmul.f32 %v1313, %v1318
      %v1347 = vmul.f32 %v1314, %v1318
      %v1348 = vmul.f32 %v1315, %v1318
      %v1349 = vmul.f32 %v1316, %v1318
      %v1350 = vmul.f32 %v1317, %v1318
      %v1351 = vadd.f32 %v1254, %v1319
      %v1352 = vadd.f32 %v1255, %v1320
      %v1353 = vadd.f32 %v1256, %v1321
      %v1354 = vadd.f32 %v1257, %v1322
      %v1355 = vadd.f32 %v1258, %v1323
      %v1356 = vadd.f32 %v1259, %v1324
      %v1357 = vadd.f32 %v1260, %v1325
      %v1358 = vadd.f32 %v1261, %v1326
      %v1359 = vadd.f32 %v1262, %v1327
      %v1360 = vadd.f32 %v1263, %v1328
      %v1361 = vadd.f32 %v1264, %v1329
      %v1362 = vadd.f32 %v1265, %v1330
      %v1363 = vadd.f32 %v1266, %v1331
      %v1364 = vadd.f32 %v1267, %v1332
      %v1365 = vadd.f32 %v1268, %v1333
      %v1366 = vadd.f32 %v1269, %v1334
      %v1367 = vadd.f32 %v1270, %v1335
      %v1368 = vadd.f32 %v1271, %v1336
      %v1369 = vadd.f32 %v1272, %v1337
      %v1370 = vadd.f32 %v1273, %v1338
      %v1371 = vadd.f32 %v1274, %v1339
      %v1372 = vadd.f32 %v1275, %v1340
      %v1373 = vadd.f32 %v1276, %v1341
      %v1374 = vadd.f32 %v1277, %v1342
      %v1375 = vadd.f32 %v1278, %v1343
      %v1376 = vadd.f32 %v1279, %v1344
      %v1377 = vadd.f32 %v1280, %v1345
      %v1378 = vadd.f32 %v1281, %v1346
      %v1379 = vadd.f32 %v1282, %v1347
      %v1380 = vadd.f32 %v1283, %v1348
      %v1381 = vadd.f32 %v1284, %v1349
      %v1382 = vadd.f32 %v1285, %v1350
      %v1383 = vld [vmem:[%s1188 + $0x2] sm:$0xff]
      %v1384 = vld [vmem:[%s1188 + $0xa] sm:$0xff]
      %v1385 = vld [vmem:[%s1188 + $0x1a] sm:$0xff]
      %v1386 = vld [vmem:[%s1188 + $0x22] sm:$0xff]
      %v1387 = vld [vmem:[%s1188 + $0x32] sm:$0xff]
      %v1388 = vld [vmem:[%s1188 + $0x3a] sm:$0xff]
      %v1389 = vld [vmem:[%s1188 + $0x4a] sm:$0xff]
      %v1390 = vld [vmem:[%s1188 + $0x52] sm:$0xff]
      %v1391 = vld [vmem:[%s1188 + $0x62] sm:$0xff]
      %v1392 = vld [vmem:[%s1188 + $0x6a] sm:$0xff]
      %v1393 = vld [vmem:[%s1188 + $0x7a] sm:$0xff]
      %v1394 = vld [vmem:[%s1188 + $0x82] sm:$0xff]
      %v1395 = vld [vmem:[%s1188 + $0x92] sm:$0xff]
      %v1396 = vld [vmem:[%s1188 + $0x9a] sm:$0xff]
      %v1397 = vld [vmem:[%s1188 + $0xaa] sm:$0xff]
      %v1398 = vld [vmem:[%s1188 + $0xb2] sm:$0xff]
      %v1399 = vld [vmem:[%s1188 + $0xc2] sm:$0xff]
      %v1400 = vld [vmem:[%s1188 + $0xca] sm:$0xff]
      %v1401 = vld [vmem:[%s1188 + $0xda] sm:$0xff]
      %v1402 = vld [vmem:[%s1188 + $0xe2] sm:$0xff]
      %v1403 = vld [vmem:[%s1188 + $0xf2] sm:$0xff]
      %v1404 = vld [vmem:[%s1188 + $0xfa] sm:$0xff]
      %v1405 = vld [vmem:[%s1188 + $0x10a] sm:$0xff]
      %v1406 = vld [vmem:[%s1188 + $0x112] sm:$0xff]
      %v1407 = vld [vmem:[%s1188 + $0x122] sm:$0xff]
      %v1408 = vld [vmem:[%s1188 + $0x12a] sm:$0xff]
      %v1409 = vld [vmem:[%s1188 + $0x13a] sm:$0xff]
      %v1410 = vld [vmem:[%s1188 + $0x142] sm:$0xff]
      %v1411 = vld [vmem:[%s1188 + $0x152] sm:$0xff]
      %v1412 = vld [vmem:[%s1188 + $0x15a] sm:$0xff]
      %v1413 = vld [vmem:[%s1188 + $0x16a] sm:$0xff]
      %v1414 = vld [vmem:[%s1188 + $0x172] sm:$0xff]
      %v1415 = vperm.slane %v605, 2
      %v1416 = vmul.f32 %v1383, %v1415
      %v1417 = vmul.f32 %v1384, %v1415
      %v1418 = vmul.f32 %v1385, %v1415
      %v1419 = vmul.f32 %v1386, %v1415
      %v1420 = vmul.f32 %v1387, %v1415
      %v1421 = vmul.f32 %v1388, %v1415
      %v1422 = vmul.f32 %v1389, %v1415
      %v1423 = vmul.f32 %v1390, %v1415
      %v1424 = vmul.f32 %v1391, %v1415
      %v1425 = vmul.f32 %v1392, %v1415
      %v1426 = vmul.f32 %v1393, %v1415
      %v1427 = vmul.f32 %v1394, %v1415
      %v1428 = vmul.f32 %v1395, %v1415
      %v1429 = vmul.f32 %v1396, %v1415
      %v1430 = vmul.f32 %v1397, %v1415
      %v1431 = vmul.f32 %v1398, %v1415
      %v1432 = vmul.f32 %v1399, %v1415
      %v1433 = vmul.f32 %v1400, %v1415
      %v1434 = vmul.f32 %v1401, %v1415
      %v1435 = vmul.f32 %v1402, %v1415
      %v1436 = vmul.f32 %v1403, %v1415
      %v1437 = vmul.f32 %v1404, %v1415
      %v1438 = vmul.f32 %v1405, %v1415
      %v1439 = vmul.f32 %v1406, %v1415
      %v1440 = vmul.f32 %v1407, %v1415
      %v1441 = vmul.f32 %v1408, %v1415
      %v1442 = vmul.f32 %v1409, %v1415
      %v1443 = vmul.f32 %v1410, %v1415
      %v1444 = vmul.f32 %v1411, %v1415
      %v1445 = vmul.f32 %v1412, %v1415
      %v1446 = vmul.f32 %v1413, %v1415
      %v1447 = vmul.f32 %v1414, %v1415
      %v1448 = vadd.f32 %v1351, %v1416
      %v1449 = vadd.f32 %v1352, %v1417
      %v1450 = vadd.f32 %v1353, %v1418
      %v1451 = vadd.f32 %v1354, %v1419
      %v1452 = vadd.f32 %v1355, %v1420
      %v1453 = vadd.f32 %v1356, %v1421
      %v1454 = vadd.f32 %v1357, %v1422
      %v1455 = vadd.f32 %v1358, %v1423
      %v1456 = vadd.f32 %v1359, %v1424
      %v1457 = vadd.f32 %v1360, %v1425
      %v1458 = vadd.f32 %v1361, %v1426
      %v1459 = vadd.f32 %v1362, %v1427
      %v1460 = vadd.f32 %v1363, %v1428
      %v1461 = vadd.f32 %v1364, %v1429
      %v1462 = vadd.f32 %v1365, %v1430
      %v1463 = vadd.f32 %v1366, %v1431
      %v1464 = vadd.f32 %v1367, %v1432
      %v1465 = vadd.f32 %v1368, %v1433
      %v1466 = vadd.f32 %v1369, %v1434
      %v1467 = vadd.f32 %v1370, %v1435
      %v1468 = vadd.f32 %v1371, %v1436
      %v1469 = vadd.f32 %v1372, %v1437
      %v1470 = vadd.f32 %v1373, %v1438
      %v1471 = vadd.f32 %v1374, %v1439
      %v1472 = vadd.f32 %v1375, %v1440
      %v1473 = vadd.f32 %v1376, %v1441
      %v1474 = vadd.f32 %v1377, %v1442
      %v1475 = vadd.f32 %v1378, %v1443
      %v1476 = vadd.f32 %v1379, %v1444
      %v1477 = vadd.f32 %v1380, %v1445
      %v1478 = vadd.f32 %v1381, %v1446
      %v1479 = vadd.f32 %v1382, %v1447
      %v1480 = vperm.slane %v254, 0
      %v1481 = vadd.f32 %v1448, %v1480
      %v1482 = vadd.f32 %v1449, %v1480
      %v1483 = vadd.f32 %v1450, %v1480
      %v1484 = vadd.f32 %v1451, %v1480
      %v1485 = vadd.f32 %v1452, %v1480
      %v1486 = vadd.f32 %v1453, %v1480
      %v1487 = vadd.f32 %v1454, %v1480
      %v1488 = vadd.f32 %v1455, %v1480
      %v1489 = vadd.f32 %v1456, %v1480
      %v1490 = vadd.f32 %v1457, %v1480
      %v1491 = vadd.f32 %v1458, %v1480
      %v1492 = vadd.f32 %v1459, %v1480
      %v1493 = vadd.f32 %v1460, %v1480
      %v1494 = vadd.f32 %v1461, %v1480
      %v1495 = vadd.f32 %v1462, %v1480
      %v1496 = vadd.f32 %v1463, %v1480
      %v1497 = vadd.f32 %v1464, %v1480
      %v1498 = vadd.f32 %v1465, %v1480
      %v1499 = vadd.f32 %v1466, %v1480
      %v1500 = vadd.f32 %v1467, %v1480
      %v1501 = vadd.f32 %v1468, %v1480
      %v1502 = vadd.f32 %v1469, %v1480
      %v1503 = vadd.f32 %v1470, %v1480
      %v1504 = vadd.f32 %v1471, %v1480
      %v1505 = vadd.f32 %v1472, %v1480
      %v1506 = vadd.f32 %v1473, %v1480
      %v1507 = vadd.f32 %v1474, %v1480
      %v1508 = vadd.f32 %v1475, %v1480
      %v1509 = vadd.f32 %v1476, %v1480
      %v1510 = vadd.f32 %v1477, %v1480
      %v1511 = vadd.f32 %v1478, %v1480
      %v1512 = vadd.f32 %v1479, %v1480
      %v1513 = vmax.f32 %v1481, 0.0
      %v1514 = vmax.f32 %v1482, 0.0
      %v1515 = vmax.f32 %v1483, 0.0
      %v1516 = vmax.f32 %v1484, 0.0
      %v1517 = vmax.f32 %v1485, 0.0
      %v1518 = vmax.f32 %v1486, 0.0
      %v1519 = vmax.f32 %v1487, 0.0
      %v1520 = vmax.f32 %v1488, 0.0
      %v1521 = vmax.f32 %v1489, 0.0
      %v1522 = vmax.f32 %v1490, 0.0
      %v1523 = vmax.f32 %v1491, 0.0
      %v1524 = vmax.f32 %v1492, 0.0
      %v1525 = vmax.f32 %v1493, 0.0
      %v1526 = vmax.f32 %v1494, 0.0
      %v1527 = vmax.f32 %v1495, 0.0
      %v1528 = vmax.f32 %v1496, 0.0
      %v1529 = vmax.f32 %v1497, 0.0
      %v1530 = vmax.f32 %v1498, 0.0
      %v1531 = vmax.f32 %v1499, 0.0
      %v1532 = vmax.f32 %v1500, 0.0
      %v1533 = vmax.f32 %v1501, 0.0
      %v1534 = vmax.f32 %v1502, 0.0
      %v1535 = vmax.f32 %v1503, 0.0
      %v1536 = vmax.f32 %v1504, 0.0
      %v1537 = vmax.f32 %v1505, 0.0
      %v1538 = vmax.f32 %v1506, 0.0
      %v1539 = vmax.f32 %v1507, 0.0
      %v1540 = vmax.f32 %v1508, 0.0
      %v1541 = vmax.f32 %v1509, 0.0
      %v1542 = vmax.f32 %v1510, 0.0
      %v1543 = vmax.f32 %v1511, 0.0
      %v1544 = vmax.f32 %v1512, 0.0
      %v1545 = vmin.f32 %v1513, 6.0
      %v1546 = vmin.f32 %v1514, 6.0
      %v1547 = vmin.f32 %v1515, 6.0
      %v1548 = vmin.f32 %v1516, 6.0
      %v1549 = vmin.f32 %v1517, 6.0
      %v1550 = vmin.f32 %v1518, 6.0
      %v1551 = vmin.f32 %v1519, 6.0
      %v1552 = vmin.f32 %v1520, 6.0
      %v1553 = vmin.f32 %v1521, 6.0
      %v1554 = vmin.f32 %v1522, 6.0
      %v1555 = vmin.f32 %v1523, 6.0
      %v1556 = vmin.f32 %v1524, 6.0
      %v1557 = vmin.f32 %v1525, 6.0
      %v1558 = vmin.f32 %v1526, 6.0
      %v1559 = vmin.f32 %v1527, 6.0
      %v1560 = vmin.f32 %v1528, 6.0
      %v1561 = vmin.f32 %v1529, 6.0
      %v1562 = vmin.f32 %v1530, 6.0
      %v1563 = vmin.f32 %v1531, 6.0
      %v1564 = vmin.f32 %v1532, 6.0
      %v1565 = vmin.f32 %v1533, 6.0
      %v1566 = vmin.f32 %v1534, 6.0
      %v1567 = vmin.f32 %v1535, 6.0
      %v1568 = vmin.f32 %v1536, 6.0
      %v1569 = vmin.f32 %v1537, 6.0
      %v1570 = vmin.f32 %v1538, 6.0
      %v1571 = vmin.f32 %v1539, 6.0
      %v1572 = vmin.f32 %v1540, 6.0
      %v1573 = vmin.f32 %v1541, 6.0
      %v1574 = vmin.f32 %v1542, 6.0
      %v1575 = vmin.f32 %v1543, 6.0
      %v1576 = vmin.f32 %v1544, 6.0
      %v1577 = vld [vmem:[%s3] sm:$0x3]
      %v1578 = vpack.c.bf16 %v1546, %v1545
      %v1579 = vpack.c.bf16 %v1548, %v1547
      %v1580 = vpack.c.bf16 %v1550, %v1549
      %v1581 = vpack.c.bf16 %v1552, %v1551
      %v1582 = vpack.c.bf16 %v1554, %v1553
      %v1583 = vpack.c.bf16 %v1556, %v1555
      %v1584 = vpack.c.bf16 %v1558, %v1557
      %v1585 = vpack.c.bf16 %v1560, %v1559
      %v1586 = vpack.c.bf16 %v1562, %v1561
      %v1587 = vpack.c.bf16 %v1564, %v1563
      %v1588 = vpack.c.bf16 %v1566, %v1565
      %v1589 = vpack.c.bf16 %v1568, %v1567
      %v1590 = vpack.c.bf16 %v1570, %v1569
      %v1591 = vpack.c.bf16 %v1572, %v1571
      %v1592 = vpack.c.bf16 %v1574, %v1573
      %v1593 = vpack.c.bf16 %v1576, %v1575
      %v1594 = vld [vmem:[%s5] sm:$0xf]
      %1596 = vset.pattern.permute.xlu0 0
      %1597 = vperm.xlu0 %1596, %v1594
      %v1598 = vpop.permute.xlu0 %1597
      %v1601 = vsel %vm514, %v1577, 0
      %v1604 = vsel %vm514, %v1578, 0
      %v1607 = vsel %vm514, %v1579, 0
      %v1610 = vsel %vm514, %v1580, 0
      %v1613 = vsel %vm514, %v1581, 0
      %v1616 = vsel %vm514, %v1582, 0
      %v1619 = vsel %vm514, %v1583, 0
      %v1622 = vsel %vm514, %v1584, 0
      %v1625 = vsel %vm514, %v1585, 0
      %v1628 = vsel %vm514, %v1586, 0
      %v1631 = vsel %vm514, %v1587, 0
      %v1634 = vsel %vm514, %v1588, 0
      %v1637 = vsel %vm514, %v1589, 0
      %v1640 = vsel %vm514, %v1590, 0
      %v1643 = vsel %vm514, %v1591, 0
      %v1646 = vsel %vm514, %v1592, 0
      %v1649 = vsel %vm514, %v1593, 0
      %1651 = vmatpush.bf16.xpose.msra.mxu0 %v1625
      %1652 = vmatpush.bf16.xpose.msra.mxu0 %v1622
      %1653 = vmatpush.bf16.xpose.msra.mxu0 %v1619
      %1654 = vmatpush.bf16.xpose.msra.mxu0 %v1616
      %1655 = vmatpush.bf16.xpose.msra.mxu0 %v1613
      %1656 = vmatpush.bf16.xpose.msra.mxu0 %v1610
      %1657 = vmatpush.bf16.xpose.msra.mxu0 %v1607
      %1658 = vmatpush.bf16.xpose.msra.mxu0 %v1604
      %1659 = vmatmul.bf16.gmra.mxu0 %v1601
      %v1660 = vpop.f32.mrf.mxu0
      %v1661 = vadd.f32 %v1598, %v1660
      %v1662 = vpop.f32.mrf.mxu0
      %1663 = vdwg.mxu0
      %1664 = vmatpush.bf16.xpose.msra.mxu0 %v1649
      %1665 = vmatpush.bf16.xpose.msra.mxu0 %v1646
      %1666 = vmatpush.bf16.xpose.msra.mxu0 %v1643
      %1667 = vmatpush.bf16.xpose.msra.mxu0 %v1640
      %1668 = vmatpush.bf16.xpose.msra.mxu0 %v1637
      %1669 = vmatpush.bf16.xpose.msra.mxu0 %v1634
      %1670 = vmatpush.bf16.xpose.msra.mxu0 %v1631
      %1671 = vmatpush.bf16.xpose.msra.mxu0 %v1628
      %1672 = vmatmul.bf16.gmra.mxu0 %v1601
      %v1673 = vpop.f32.mrf.mxu0
      %v1674 = vadd.f32 %v1598, %v1673
      %v1675 = vpop.f32.mrf.mxu0
      %1676 = vdwg.mxu0
      %v1677 = vlaneseq
      %v1678 = vshrl.u32 %v1677, 7
      %v1679 = vlaneseq
      %v1680 = vand.u32 %v1679, 127
      %vm1681 = vcmp.eq.s32.totalorder %v1678, %v1680
      %v1682 = vsel %vm1681, 1, 0
      %v1683 = vcvt.s32.f32 %v1682
      %v1685 = vsel %vm305, %v1683, 0
      %v1688 = vsel %vm305, %v255, 0
      %v1691 = vsel %vm305, %v256, 0
      %v1694 = vsel %vm305, %v257, 0
      %v1697 = vsel %vm305, %v258, 0
      %v1700 = vsel %vm305, %v259, 0
      %v1703 = vsel %vm305, %v260, 0
      %v1706 = vsel %vm305, %v261, 0
      %v1709 = vsel %vm305, %v262, 0
      %v1712 = vsel %vm305, %v263, 0
      %v1715 = vsel %vm305, %v264, 0
      %v1718 = vsel %vm305, %v265, 0
      %v1721 = vsel %vm305, %v266, 0
      %v1724 = vsel %vm305, %v267, 0
      %v1727 = vsel %vm305, %v268, 0
      %v1730 = vsel %vm305, %v269, 0
      %v1733 = vsel %vm305, %v270, 0
      %v1736 = vsel %vm305, %v271, 0
      %v1739 = vsel %vm305, %v272, 0
      %v1742 = vsel %vm305, %v273, 0
      %v1745 = vsel %vm305, %v274, 0
      %v1748 = vsel %vm305, %v275, 0
      %v1751 = vsel %vm305, %v276, 0
      %v1754 = vsel %vm305, %v277, 0
      %v1757 = vsel %vm305, %v278, 0
      %v1760 = vsel %vm305, %v279, 0
      %v1763 = vsel %vm305, %v280, 0
      %v1766 = vsel %vm305, %v281, 0
      %v1769 = vsel %vm305, %v282, 0
      %v1772 = vsel %vm305, %v283, 0
      %v1775 = vsel %vm305, %v284, 0
      %v1778 = vsel %vm305, %v285, 0
      %v1781 = vsel %vm305, %v286, 0
      %1783 = vmatpush.xpose.msra.mxu0 %v1733
      %1784 = vmatpush.xpose.msra.mxu0 %v1730
      %1785 = vmatpush.xpose.msra.mxu0 %v1727
      %1786 = vmatpush.xpose.msra.mxu0 %v1724
      %1787 = vmatpush.xpose.msra.mxu0 %v1721
      %1788 = vmatpush.xpose.msra.mxu0 %v1718
      %1789 = vmatpush.xpose.msra.mxu0 %v1715
      %1790 = vmatpush.xpose.msra.mxu0 %v1712
      %1791 = vmatpush.xpose.msra.mxu0 %v1709
      %1792 = vmatpush.xpose.msra.mxu0 %v1706
      %1793 = vmatpush.xpose.msra.mxu0 %v1703
      %1794 = vmatpush.xpose.msra.mxu0 %v1700
      %1795 = vmatpush.xpose.msra.mxu0 %v1697
      %1796 = vmatpush.xpose.msra.mxu0 %v1694
      %1797 = vmatpush.xpose.msra.mxu0 %v1691
      %1798 = vmatpush.xpose.msra.mxu0 %v1688
      %1799 = vmatmul.f32.gmra.mxu0 %v1685
      %v1800 = vpop.f32.mrf.mxu0
      %v1801 = vadd.f32 0.0, %v1800
      %1802 = vdwg.mxu0
      %1803 = vmatpush.xpose.msra.mxu0 %v1781
      %1804 = vmatpush.xpose.msra.mxu0 %v1778
      %1805 = vmatpush.xpose.msra.mxu0 %v1775
      %1806 = vmatpush.xpose.msra.mxu0 %v1772
      %1807 = vmatpush.xpose.msra.mxu0 %v1769
      %1808 = vmatpush.xpose.msra.mxu0 %v1766
      %1809 = vmatpush.xpose.msra.mxu0 %v1763
      %1810 = vmatpush.xpose.msra.mxu0 %v1760
      %1811 = vmatpush.xpose.msra.mxu0 %v1757
      %1812 = vmatpush.xpose.msra.mxu0 %v1754
      %1813 = vmatpush.xpose.msra.mxu0 %v1751
      %1814 = vmatpush.xpose.msra.mxu0 %v1748
      %1815 = vmatpush.xpose.msra.mxu0 %v1745
      %1816 = vmatpush.xpose.msra.mxu0 %v1742
      %1817 = vmatpush.xpose.msra.mxu0 %v1739
      %1818 = vmatpush.xpose.msra.mxu0 %v1736
      %1819 = vmatmul.f32.gmra.mxu0 %v1685
      %v1820 = vpop.f32.mrf.mxu0
      %v1821 = vadd.f32 0.0, %v1820
      %1822 = vdwg.mxu0
      %v1823 = vadd.f32 %v1661, %v1801
      %v1824 = vadd.f32 %v1674, %v1821
      %v1827 = vrot.slane %v1824, 4
      %vm1828 = vcmask 1043456
      %v1829 = vsel %vm1828, %v1823, %v1827
      %1831 = vst [vmem:[%s251] sm:$0xff] %v1829
      %p1832 = scmp.lt.s32.totalorder %s17, 1
      %s1833 = scalar_select %p1832, %s17, 1
      %s1834 = smul.addr %s1833, 2
      %s1835 = smul.addr %s1834, 4
      %s1836 = scalar_lea.vmem %s6, %s1835
      // Predicated region
      $region45: #{inverted_residual_forward.1} parent=43 // pred_check
        %p1837 = pneg %p166
      $region46: #{inverted_residual_forward.1} parent=43 // pred_check_branch
        %1839 = sbr.rel (%p1837) target = $region48
      $region47: #{inverted_residual_forward.1} parent=43 // pred_region
        _
      $region48: #{inverted_residual_forward.1} parent=43 // pred_fallthru
        _
    $region44: #{inverted_residual_forward.1} parent=5 // pred_fallthru
      _
    %p1840 = scmp.le.s32.totalorder 2, %s12
    // Predicated region
    $region49: #{inverted_residual_forward.1} parent=5 // pred_check
      %p1841 = pneg %p1840
    $region50: #{inverted_residual_forward.1} parent=5 // pred_check_branch
      %1843 = sbr.rel (%p1841) target = $region52
    $region51: #{inverted_residual_forward.1} parent=5 // pred_region
      %s1844 = ssub.s32 %s12, 2
      // Predicated region
      $region53: #{inverted_residual_forward.1} parent=51 // pred_check
        %p1845 = pneg %p172
      $region54: #{inverted_residual_forward.1} parent=51 // pred_check_branch
        %1847 = sbr.rel (%p1845) target = $region56
      $region55: #{inverted_residual_forward.1} parent=51 // pred_region
        %p1848 = scmp.lt.s32.totalorder %s18, 1
        %s1849 = scalar_select %p1848, %s18, 1
        %s1850 = smul.addr %s1849, 2
        %s1851 = smul.addr %s1850, 4
        %s1852 = scalar_lea.vmem %s6, %s1851
      $region56: #{inverted_residual_forward.1} parent=51 // pred_fallthru
        _
    $region52: #{inverted_residual_forward.1} parent=5 // pred_fallthru
      _
  $region6: #{inverted_residual_forward.1} parent=0 // loop_footer
    %s16 = sadd.s32 1, %s12
  $region7: #{inverted_residual_forward.1} parent=0 // loop_footer_branch
    %11 = sbr.rel target = $region3
  $region8: #{inverted_residual_forward.1} parent=0 // loop_exit
    _

</llo_original>
